<compile_context>
chip_gen: v7x
topology: tpu7x:2x2x1
jax: 0.10.0
libtpu: 0.0.40
codegen_flags: <defaults>
</compile_context>

<pallas_src>
import jax
import jax.numpy as jnp
from jax.experimental import pallas as pl
from jax.experimental.pallas import tpu as pltpu


def attention_kernel(hid_ref, enc_ref, mask_ref, wh_ref, we_ref, b_ref, v_ref,
                     out_ref):
    TB, S, Fe = enc_ref.shape
    Hd = wh_ref.shape[1]

    # Hoisted hidden projection: single (TB, Hd) @ (Hd, Hd) matmul per tile
    # (independent of S), accumulated in f32.
    hproj = (jnp.dot(hid_ref[...], wh_ref[...],
                     preferred_element_type=jnp.float32)
             + b_ref[...])                                    # (TB, Hd) f32

    # Encoder projection: one big (TB*S, Fe) @ (Fe, Hd) MXU matmul.
    # S is a multiple of 8 in the demo, so this reshape is a pure view.
    e_flat = enc_ref[...].reshape(TB * S, Fe)
    eproj = jnp.dot(e_flat, we_ref[...],
                    preferred_element_type=jnp.float32)       # (TB*S, Hd) f32

    # energy = tanh([hidden, enc] @ attn_W.T + attn_b)   (f32, EUP tanh)
    energy = jnp.tanh(eproj.reshape(TB, S, Hd) + hproj.reshape(TB, 1, Hd))

    # scores = energy @ v, computed as VPU multiply + cross-lane reduce so the
    # result is lane-dense (TB, S) and we avoid an N=1 MXU matmul.
    v_row = v_ref[...].reshape(1, 1, Hd)                      # f32
    scores = jnp.sum(energy * v_row, axis=-1)                 # (TB, S) f32

    # masked_fill(mask == 0, -1e10)   (mask is lane-dense (TB, S))
    scores = jnp.where(mask_ref[...] == 0.0, jnp.float32(-1.0e10), scores)

    # softmax over src_len (lane axis)
    smax = jnp.max(scores, axis=-1, keepdims=True)
    ex = jnp.exp(scores - smax)
    denom = jnp.sum(ex, axis=-1, keepdims=True)
    # exact divide to match reference bit-closely; pl.reciprocal(denom,
    # approx=True) is available for a free EUP approximation if tolerable.
    out_ref[...] = (ex / denom).astype(out_ref.dtype)


def _pick_batch_tile(B, S):
    """Pick TB batches per grid step targeting ~512 matmul rows per tile,
    while satisfying the (8, 128) second-minor block constraint."""
    tb = max(1, 512 // max(S, 1))
    if tb >= B:
        return B
    tb = (tb // 8) * 8
    while tb >= 8:
        if B % tb == 0:
            return tb
        tb -= 8
    return B


def attention_forward(hidden, encoder_outputs, wh, we, b, v, mask=None,
                      compute_dtype=jnp.float32):
    """hidden:[B,Hd], encoder_outputs:[B,S,Fe], mask:[B,S] or None -> [B,S].

    compute_dtype: dtype used for the streamed matmul inputs (f32 or bf16);
    accumulation, tanh, masking and softmax always run in f32.
    """
    B, S, Fe = encoder_outputs.shape
    Hd = hidden.shape[1]

    if mask is None:
        mask = jnp.ones((B, S), dtype=jnp.float32)
    mask = mask.astype(jnp.float32)                # lane-dense (B, S)

    hid = hidden.astype(compute_dtype)
    enc = encoder_outputs.astype(compute_dtype)
    whc = wh.astype(compute_dtype)
    wec = we.astype(compute_dtype)
    b2 = b.reshape(1, Hd).astype(jnp.float32)      # added after f32 accumulation
    v2 = v.reshape(1, Hd).astype(jnp.float32)      # row vector (lane-dense)

    TB = _pick_batch_tile(B, S)
    grid = (B // TB,)

    out = pl.pallas_call(
        attention_kernel,
        out_shape=jax.ShapeDtypeStruct((B, S), jnp.float32),
        grid_spec=pltpu.PrefetchScalarGridSpec(
            num_scalar_prefetch=0,
            grid=grid,
            in_specs=[
                pl.BlockSpec((TB, Hd), lambda i: (i, 0)),       # hidden
                pl.BlockSpec((TB, S, Fe), lambda i: (i, 0, 0)), # encoder_outputs
                pl.BlockSpec((TB, S), lambda i: (i, 0)),        # mask
                pl.BlockSpec((Hd, Hd), lambda i: (0, 0)),       # W_h (resident)
                pl.BlockSpec((Fe, Hd), lambda i: (0, 0)),       # W_e (resident)
                pl.BlockSpec((1, Hd), lambda i: (0, 0)),        # bias
                pl.BlockSpec((1, Hd), lambda i: (0, 0)),        # v row
            ],
            out_specs=pl.BlockSpec((TB, S), lambda i: (i, 0)),  # lane-dense out
        ),
        compiler_params=pltpu.CompilerParams(
            dimension_semantics=("parallel",)),
    )(hid, enc, mask, whc, wec, b2, v2)
    return out


def reference_forward(hidden, encoder_outputs, wh, we, b, v, mask=None):
    """Pure-JAX reference (mirrors the PyTorch forward)."""
    energy = jnp.tanh(jnp.einsum("bh,hd->bd", hidden, wh)[:, None, :]
                      + jnp.einsum("bsf,fd->bsd", encoder_outputs, we)
                      + b[None, None, :])
    attn = jnp.einsum("bsd,do->bso", energy, v)[..., 0]
    if mask is not None:
        attn = jnp.where(mask == 0, -1.0e10, attn)
    return jax.nn.softmax(attn, axis=1)


if __name__ == "__main__":
    # Small shapes consistent with the module's forward; chosen so the grid
    # has multiple batch tiles (TB=8 -> grid=(2,)).
    B = 16                      # batch_size
    S = 64                      # src_len
    enc_hidden_dim = 16
    dec_hidden_dim = 32
    Fe = 2 * enc_hidden_dim     # encoder_outputs feature dim
    Hd = dec_hidden_dim

    key = jax.random.PRNGKey(0)
    k_h, k_e, k_w, k_b, k_v = jax.random.split(key, 5)

    hidden = jax.random.normal(k_h, (B, Hd), dtype=jnp.float32)
    encoder_outputs = jax.random.normal(k_e, (B, S, Fe), dtype=jnp.float32)

    # Deterministic parameter init (PyTorch-like uniform(-1/sqrt(fan_in), ...)).
    fan_in_attn = Fe + Hd
    bound_attn = 1.0 / (fan_in_attn ** 0.5)
    attn_w_t = jax.random.uniform(k_w, (fan_in_attn, Hd), jnp.float32,
                                  -bound_attn, bound_attn)   # = attn.weight.T
    attn_b = jax.random.uniform(k_b, (Hd,), jnp.float32,
                                -bound_attn, bound_attn)
    # cat order is (hidden, encoder_outputs): first Hd rows are the hidden part.
    wh = attn_w_t[:Hd, :]       # (Hd, Hd)
    we = attn_w_t[Hd:, :]       # (Fe, Hd)

    bound_v = 1.0 / (Hd ** 0.5)
    v = jax.random.uniform(k_v, (Hd, 1), jnp.float32, -bound_v, bound_v)

    # Padding mask: zero out some source positions.
    mask = jnp.ones((B, S), dtype=jnp.float32)
    mask = mask.at[1, S - 5:].set(0.0)
    mask = mask.at[7, :S // 2].set(0.0)

    # f32 path (exact vs reference).
    out = attention_forward(hidden, encoder_outputs, wh, we, attn_b, v, mask)
    out = jax.block_until_ready(out)

    ref = reference_forward(hidden, encoder_outputs, wh, we, attn_b, v, mask)
    assert out.shape == (B, S)
    assert jnp.allclose(out, ref, rtol=1e-5, atol=1e-5), "mismatch vs reference"
    assert jnp.allclose(jnp.sum(out, axis=1), 1.0, atol=1e-5)

    # bf16 fast path (halves HBM traffic of the dominant encoder stream;
    # matmul accumulation and softmax stay in f32).
    out_bf16 = attention_forward(hidden, encoder_outputs, wh, we, attn_b, v,
                                 mask, compute_dtype=jnp.bfloat16)
    out_bf16 = jax.block_until_ready(out_bf16)
    assert out_bf16.shape == (B, S)
    assert jnp.allclose(jnp.sum(out_bf16, axis=1), 1.0, atol=1e-3)
    assert jnp.allclose(out_bf16, ref, atol=5e-2)

    print("KERNEL_OK")
</pallas_src>

<mosaic_0001>
module attributes {stable_mosaic.version = 11 : i64} {
  func.func @attention_kernel(%arg0: i32, %arg1: memref<8x32xf32, #tpu.memory_space<vmem>>, %arg2: memref<8x64x32xf32, #tpu.memory_space<vmem>>, %arg3: memref<8x64xf32, #tpu.memory_space<vmem>>, %arg4: memref<32x32xf32, #tpu.memory_space<vmem>>, %arg5: memref<32x32xf32, #tpu.memory_space<vmem>>, %arg6: memref<1x32xf32, #tpu.memory_space<vmem>>, %arg7: memref<1x32xf32, #tpu.memory_space<vmem>>, %arg8: memref<8x64xf32, #tpu.memory_space<vmem>>) attributes {dimension_semantics = [#tpu.dimension_semantics<parallel>], iteration_bounds = array<i64: 2>, scalar_prefetch = 0 : i64, scratch_operands = 0 : i64, tpu.core_type = #tpu.core_type<tc>, window_params = [{transform_indices = @transform_0, window_bounds = array<i64: 8, 32>}, {transform_indices = @transform_1, window_bounds = array<i64: 8, 64, 32>}, {transform_indices = @transform_2, window_bounds = array<i64: 8, 64>}, {pipeline_mode = #tpu.pipeline_mode<synchronous>, transform_indices = @transform_3, window_bounds = array<i64: 32, 32>}, {pipeline_mode = #tpu.pipeline_mode<synchronous>, transform_indices = @transform_4, window_bounds = array<i64: 32, 32>}, {pipeline_mode = #tpu.pipeline_mode<synchronous>, transform_indices = @transform_5, window_bounds = array<i64: 1, 32>}, {pipeline_mode = #tpu.pipeline_mode<synchronous>, transform_indices = @transform_6, window_bounds = array<i64: 1, 32>}, {transform_indices = @transform_7, window_bounds = array<i64: 8, 64>}]} {
    %c0 = arith.constant 0 : index
    %c0_0 = arith.constant 0 : index
    %0 = vector.load %arg1[%c0, %c0_0] : memref<8x32xf32, #tpu.memory_space<vmem>>, vector<8x32xf32>
    %c0_1 = arith.constant 0 : index
    %c0_2 = arith.constant 0 : index
    %1 = vector.load %arg4[%c0_1, %c0_2] : memref<32x32xf32, #tpu.memory_space<vmem>>, vector<32x32xf32>
    %cst = arith.constant dense<0.000000e+00> : vector<8x32xf32>
    %2 = tpu.matmul %0, %1, %cst {dimension_numbers = #tpu.dot_dimension_numbers<[1], [0], [0], [1], [0, 0, 1, 1], [], []>} : vector<8x32xf32>, vector<32x32xf32>, vector<8x32xf32> -> vector<8x32xf32>
    %c0_3 = arith.constant 0 : index
    %c0_4 = arith.constant 0 : index
    %3 = vector.load %arg6[%c0_3, %c0_4] : memref<1x32xf32, #tpu.memory_space<vmem>>, vector<1x32xf32>
    %4 = vector.broadcast %3 : vector<1x32xf32> to vector<8x32xf32>
    %5 = arith.addf %2, %4 : vector<8x32xf32>
    %c0_5 = arith.constant 0 : index
    %c0_6 = arith.constant 0 : index
    %c0_7 = arith.constant 0 : index
    %6 = vector.load %arg2[%c0_5, %c0_6, %c0_7] : memref<8x64x32xf32, #tpu.memory_space<vmem>>, vector<8x64x32xf32>
    %7 = vector.shape_cast %6 : vector<8x64x32xf32> to vector<512x32xf32>
    %c0_8 = arith.constant 0 : index
    %c0_9 = arith.constant 0 : index
    %8 = vector.load %arg5[%c0_8, %c0_9] : memref<32x32xf32, #tpu.memory_space<vmem>>, vector<32x32xf32>
    %cst_10 = arith.constant dense<0.000000e+00> : vector<512x32xf32>
    %9 = tpu.matmul %7, %8, %cst_10 {dimension_numbers = #tpu.dot_dimension_numbers<[1], [0], [0], [1], [0, 0, 1, 1], [], []>} : vector<512x32xf32>, vector<32x32xf32>, vector<512x32xf32> -> vector<512x32xf32>
    %10 = vector.shape_cast %9 : vector<512x32xf32> to vector<8x64x32xf32>
    %11 = vector.shape_cast %5 : vector<8x32xf32> to vector<8x1x32xf32>
    %12 = vector.broadcast %11 : vector<8x1x32xf32> to vector<8x64x32xf32>
    %13 = arith.addf %10, %12 : vector<8x64x32xf32>
    %14 = math.tanh %13 : vector<8x64x32xf32>
    %c0_11 = arith.constant 0 : index
    %c0_12 = arith.constant 0 : index
    %15 = vector.load %arg7[%c0_11, %c0_12] : memref<1x32xf32, #tpu.memory_space<vmem>>, vector<1x32xf32>
    %16 = vector.shape_cast %15 : vector<1x32xf32> to vector<1x1x32xf32>
    %17 = vector.broadcast %16 : vector<1x1x32xf32> to vector<8x64x32xf32>
    %18 = arith.mulf %14, %17 : vector<8x64x32xf32>
    %cst_13 = arith.constant dense<0.000000e+00> : vector<8x64xf32>
    %19 = vector.multi_reduction <add>, %18, %cst_13 [2] : vector<8x64x32xf32> to vector<8x64xf32>
    %c0_14 = arith.constant 0 : index
    %c0_15 = arith.constant 0 : index
    %20 = vector.load %arg3[%c0_14, %c0_15] : memref<8x64xf32, #tpu.memory_space<vmem>>, vector<8x64xf32>
    %cst_16 = arith.constant 0.000000e+00 : f32
    %21 = vector.broadcast %cst_16 : f32 to vector<8x64xf32>
    %22 = arith.cmpf oeq, %20, %21 : vector<8x64xf32>
    %cst_17 = arith.constant -1.000000e+10 : f32
    %23 = vector.broadcast %cst_17 : f32 to vector<8x64xf32>
    %24 = arith.select %22, %23, %19 : vector<8x64xi1>, vector<8x64xf32>
    %cst_18 = arith.constant dense<0xFF800000> : vector<8xf32>
    %25 = vector.multi_reduction <maximumf>, %24, %cst_18 [1] : vector<8x64xf32> to vector<8xf32>
    %26 = vector.shape_cast %25 : vector<8xf32> to vector<8x1xf32>
    %27 = vector.broadcast %26 : vector<8x1xf32> to vector<8x64xf32>
    %28 = arith.subf %24, %27 : vector<8x64xf32>
    %29 = math.exp %28 : vector<8x64xf32>
    %cst_19 = arith.constant dense<0.000000e+00> : vector<8xf32>
    %30 = vector.multi_reduction <add>, %29, %cst_19 [1] : vector<8x64xf32> to vector<8xf32>
    %31 = vector.shape_cast %30 : vector<8xf32> to vector<8x1xf32>
    %32 = vector.broadcast %31 : vector<8x1xf32> to vector<8x64xf32>
    %33 = arith.divf %29, %32 : vector<8x64xf32>
    %c0_20 = arith.constant 0 : index
    %c0_21 = arith.constant 0 : index
    %34 = vector.load %arg8[%c0_20, %c0_21] : memref<8x64xf32, #tpu.memory_space<vmem>>, vector<8x64xf32>
    tpu.vector_store %arg8[%c0_20, %c0_21], %33 {strides = array<i32>} : memref<8x64xf32, #tpu.memory_space<vmem>>, vector<8x64xf32>,
    return
  }
  func.func @transform_0(%arg0: i32) -> (i32, i32) {
    %c0_i32 = arith.constant 0 : i32
    %c0_i32_0 = arith.constant 0 : i32
    return %arg0, %c0_i32 : i32, i32
  }
  func.func @transform_1(%arg0: i32) -> (i32, i32, i32) {
    %c0_i32 = arith.constant 0 : i32
    %c0_i32_0 = arith.constant 0 : i32
    %c0_i32_1 = arith.constant 0 : i32
    return %arg0, %c0_i32, %c0_i32_0 : i32, i32, i32
  }
  func.func @transform_2(%arg0: i32) -> (i32, i32) {
    %c0_i32 = arith.constant 0 : i32
    %c0_i32_0 = arith.constant 0 : i32
    return %arg0, %c0_i32 : i32, i32
  }
  func.func @transform_3(%arg0: i32) -> (i32, i32) {
    %c0_i32 = arith.constant 0 : i32
    %c0_i32_0 = arith.constant 0 : i32
    %c0_i32_1 = arith.constant 0 : i32
    return %c0_i32, %c0_i32_0 : i32, i32
  }
  func.func @transform_4(%arg0: i32) -> (i32, i32) {
    %c0_i32 = arith.constant 0 : i32
    %c0_i32_0 = arith.constant 0 : i32
    %c0_i32_1 = arith.constant 0 : i32
    return %c0_i32, %c0_i32_0 : i32, i32
  }
  func.func @transform_5(%arg0: i32) -> (i32, i32) {
    %c0_i32 = arith.constant 0 : i32
    %c0_i32_0 = arith.constant 0 : i32
    %c0_i32_1 = arith.constant 0 : i32
    return %c0_i32, %c0_i32_0 : i32, i32
  }
  func.func @transform_6(%arg0: i32) -> (i32, i32) {
    %c0_i32 = arith.constant 0 : i32
    %c0_i32_0 = arith.constant 0 : i32
    %c0_i32_1 = arith.constant 0 : i32
    return %c0_i32, %c0_i32_0 : i32, i32
  }
  func.func @transform_7(%arg0: i32) -> (i32, i32) {
    %c0_i32 = arith.constant 0 : i32
    %c0_i32_0 = arith.constant 0 : i32
    return %arg0, %c0_i32 : i32, i32
  }
}

</mosaic_0001>

<llo_original>
// kernel: tpu_custom_call.1
$region0: #{tpu_custom_call.1}
  #allocation0 [shape = 'u32[]', space=smem, size = 0x4, offset = 0x4, fixed_abs, tag = 'smem constant byte address 0x4 - core index']
  #allocation1 [shape = 'u32[144,128]{1,0:T(1,128)}', space=vmem, size = 0x12000, scoped, tag = 'internal scratch']
  %s0 = inlined_call_operand.vmem [shape: f32[16,32], index: 0, kind: input, shape index: {}]
  %s1 = inlined_call_operand.vmem [shape: f32[16,64,32], index: 1, kind: input, shape index: {}]
  %s2 = inlined_call_operand.vmem [shape: f32[16,64], index: 2, kind: input, shape index: {}]
  %s3 = inlined_call_operand.vmem [shape: f32[32,32], index: 3, kind: input, shape index: {}]
  %s4 = inlined_call_operand.vmem [shape: f32[32,32], index: 4, kind: input, shape index: {}]
  %s5 = inlined_call_operand.vmem [shape: f32[1,32], index: 5, kind: input, shape index: {}]
  %s6 = inlined_call_operand.vmem [shape: f32[1,32], index: 6, kind: input, shape index: {}]
  %s7 = inlined_call_operand.hbm [shape: f32[16,64], index: 7, kind: output, shape index: {}]
  %s8 = sld [smem:[#allocation0]]
  $region61: #{tpu_custom_call.1} parent=0
    _
  %s10 = ssub.s32 1, %s8
  %s11 = scalar_select 0, %s10, %s8
  $region1: #{tpu_custom_call.1} parent=0
    #allocation2 [shape = 'u8[8192]{0}', space=vmem, size = 0x2000, scoped, tag = 'output window, operand 0']
    #allocation3 [shape = 's32[2]{0}', space=sflag, size = 0x8, scoped, tag = 'scoped memory for tpu_custom_call.1']
    %12 = vsyncpa [#allocation3], 0
    %s13 = scalar_lea.sflag [#allocation3], 1
    %14 = vsyncpa %s13, 0
    loop: start=0, step=1, limit=4
    $region2: #{tpu_custom_call.1} parent=1 // loop_pre_header
      _
    $region3: #{tpu_custom_call.1} parent=1 // loop_header
      %s16 = sphi 0, %s20
      %p17 = scmp.ge.s32.totalorder %s16, 4
      %s26 = sphi 0, %s28
      %s29 = sphi 0, %s26
      %s30 = sphi 0, %s29
      %s46 = sphi 0, %s30
      %s52 = sphi 0, %s54
      %s55 = sphi 0, %s52
      %s56 = sphi 0, %s55
      %s72 = sphi 0, %s56
      %s78 = sphi 0, %s80
      %s81 = sphi 0, %s78
      %s82 = sphi 0, %s81
      %s98 = sphi 0, %s82
      %s102 = sphi 0, %s102
      %s104 = sphi 0, %s102
      %s105 = sphi 0, %s104
      %s119 = sphi 0, %s105
      %s123 = sphi 0, %s123
      %s125 = sphi 0, %s123
      %s126 = sphi 0, %s125
      %s140 = sphi 0, %s126
      %s144 = sphi 0, %s144
      %s146 = sphi 0, %s144
      %s147 = sphi 0, %s146
      %s161 = sphi 0, %s147
      %s165 = sphi 0, %s165
      %s167 = sphi 0, %s165
      %s168 = sphi 0, %s167
      %s182 = sphi 0, %s168
      %s188 = sphi 0, %s190
      %s191 = sphi 0, %s188
      %s192 = sphi 0, %s191
      %s208 = sphi 0, %s192
    $region4: #{tpu_custom_call.1} parent=1 // loop_header_branch
      %19 = sbr.rel (%p17) target = $region8
    $region5: #{tpu_custom_call.1} parent=1 // loop_body
      %s21 = ssub.s32 %s16, 1
      %s22 = ssub.s32 %s16, 2
      %s23 = sadd.s32 %s16, 1
      %s24 = ssub.s32 %s16, %s23
      %p25 = scmp.eq.s32.totalorder %s24, 0
      %s27 = sadd.s32 %s26, 1
      %s28 = scalar_select %p25, %s26, %s27
      %p31 = pneg %p25
      %p32 = scmp.eq.s32.totalorder %s16, 1
      %p33 = por %p31, %p32
      %p34 = scmp.ne.s32.totalorder %s26, %s29
      %p35 = scmp.eq.s32.totalorder %s16, 0
      %p36 = por %p34, %p35
      %p37 = scmp.ne.s32.totalorder %s26, %s29
      %p38 = scmp.eq.s32.totalorder %s21, 1
      %p39 = por %p37, %p38
      %p40 = scmp.ne.s32.totalorder %s29, %s30
      %p41 = scmp.eq.s32.totalorder %s21, 0
      %p42 = por %p40, %p41
      %p43 = scmp.ne.s32.totalorder %s29, %s30
      %p44 = scmp.eq.s32.totalorder %s22, 1
      %p45 = por %p43, %p44
      %p47 = scmp.ne.s32.totalorder %s30, %s46
      %p48 = scmp.eq.s32.totalorder %s22, 0
      %p49 = por %p47, %p48
      %s50 = ssub.s32 %s16, %s23
      %p51 = scmp.eq.s32.totalorder %s50, 0
      %s53 = sadd.s32 %s52, 1
      %s54 = scalar_select %p51, %s52, %s53
      %p57 = pneg %p51
      %p58 = scmp.eq.s32.totalorder %s16, 1
      %p59 = por %p57, %p58
      %p60 = scmp.ne.s32.totalorder %s52, %s55
      %p61 = scmp.eq.s32.totalorder %s16, 0
      %p62 = por %p60, %p61
      %p63 = scmp.ne.s32.totalorder %s52, %s55
      %p64 = scmp.eq.s32.totalorder %s21, 1
      %p65 = por %p63, %p64
      %p66 = scmp.ne.s32.totalorder %s55, %s56
      %p67 = scmp.eq.s32.totalorder %s21, 0
      %p68 = por %p66, %p67
      %p69 = scmp.ne.s32.totalorder %s55, %s56
      %p70 = scmp.eq.s32.totalorder %s22, 1
      %p71 = por %p69, %p70
      %p73 = scmp.ne.s32.totalorder %s56, %s72
      %p74 = scmp.eq.s32.totalorder %s22, 0
      %p75 = por %p73, %p74
      %s76 = ssub.s32 %s16, %s23
      %p77 = scmp.eq.s32.totalorder %s76, 0
      %s79 = sadd.s32 %s78, 1
      %s80 = scalar_select %p77, %s78, %s79
      %p83 = pneg %p77
      %p84 = scmp.eq.s32.totalorder %s16, 1
      %p85 = por %p83, %p84
      %p86 = scmp.ne.s32.totalorder %s78, %s81
      %p87 = scmp.eq.s32.totalorder %s16, 0
      %p88 = por %p86, %p87
      %p89 = scmp.ne.s32.totalorder %s78, %s81
      %p90 = scmp.eq.s32.totalorder %s21, 1
      %p91 = por %p89, %p90
      %p92 = scmp.ne.s32.totalorder %s81, %s82
      %p93 = scmp.eq.s32.totalorder %s21, 0
      %p94 = por %p92, %p93
      %p95 = scmp.ne.s32.totalorder %s81, %s82
      %p96 = scmp.eq.s32.totalorder %s22, 1
      %p97 = por %p95, %p96
      %p99 = scmp.ne.s32.totalorder %s82, %s98
      %p100 = scmp.eq.s32.totalorder %s22, 0
      %p101 = por %p99, %p100
      %s103 = sadd.s32 %s102, 1
      %p106 = scmp.eq.s32.totalorder %s16, 1
      %p107 = scmp.ne.s32.totalorder %s102, %s104
      %p108 = scmp.eq.s32.totalorder %s16, 0
      %p109 = por %p107, %p108
      %p110 = scmp.ne.s32.totalorder %s102, %s104
      %p111 = scmp.eq.s32.totalorder %s21, 1
      %p112 = por %p110, %p111
      %p113 = scmp.ne.s32.totalorder %s104, %s105
      %p114 = scmp.eq.s32.totalorder %s21, 0
      %p115 = por %p113, %p114
      %p116 = scmp.ne.s32.totalorder %s104, %s105
      %p117 = scmp.eq.s32.totalorder %s22, 1
      %p118 = por %p116, %p117
      %p120 = scmp.ne.s32.totalorder %s105, %s119
      %p121 = scmp.eq.s32.totalorder %s22, 0
      %p122 = por %p120, %p121
      %s124 = sadd.s32 %s123, 1
      %p127 = scmp.eq.s32.totalorder %s16, 1
      %p128 = scmp.ne.s32.totalorder %s123, %s125
      %p129 = scmp.eq.s32.totalorder %s16, 0
      %p130 = por %p128, %p129
      %p131 = scmp.ne.s32.totalorder %s123, %s125
      %p132 = scmp.eq.s32.totalorder %s21, 1
      %p133 = por %p131, %p132
      %p134 = scmp.ne.s32.totalorder %s125, %s126
      %p135 = scmp.eq.s32.totalorder %s21, 0
      %p136 = por %p134, %p135
      %p137 = scmp.ne.s32.totalorder %s125, %s126
      %p138 = scmp.eq.s32.totalorder %s22, 1
      %p139 = por %p137, %p138
      %p141 = scmp.ne.s32.totalorder %s126, %s140
      %p142 = scmp.eq.s32.totalorder %s22, 0
      %p143 = por %p141, %p142
      %s145 = sadd.s32 %s144, 1
      %p148 = scmp.eq.s32.totalorder %s16, 1
      %p149 = scmp.ne.s32.totalorder %s144, %s146
      %p150 = scmp.eq.s32.totalorder %s16, 0
      %p151 = por %p149, %p150
      %p152 = scmp.ne.s32.totalorder %s144, %s146
      %p153 = scmp.eq.s32.totalorder %s21, 1
      %p154 = por %p152, %p153
      %p155 = scmp.ne.s32.totalorder %s146, %s147
      %p156 = scmp.eq.s32.totalorder %s21, 0
      %p157 = por %p155, %p156
      %p158 = scmp.ne.s32.totalorder %s146, %s147
      %p159 = scmp.eq.s32.totalorder %s22, 1
      %p160 = por %p158, %p159
      %p162 = scmp.ne.s32.totalorder %s147, %s161
      %p163 = scmp.eq.s32.totalorder %s22, 0
      %p164 = por %p162, %p163
      %s166 = sadd.s32 %s165, 1
      %p169 = scmp.eq.s32.totalorder %s16, 1
      %p170 = scmp.ne.s32.totalorder %s165, %s167
      %p171 = scmp.eq.s32.totalorder %s16, 0
      %p172 = por %p170, %p171
      %p173 = scmp.ne.s32.totalorder %s165, %s167
      %p174 = scmp.eq.s32.totalorder %s21, 1
      %p175 = por %p173, %p174
      %p176 = scmp.ne.s32.totalorder %s167, %s168
      %p177 = scmp.eq.s32.totalorder %s21, 0
      %p178 = por %p176, %p177
      %p179 = scmp.ne.s32.totalorder %s167, %s168
      %p180 = scmp.eq.s32.totalorder %s22, 1
      %p181 = por %p179, %p180
      %p183 = scmp.ne.s32.totalorder %s168, %s182
      %p184 = scmp.eq.s32.totalorder %s22, 0
      %p185 = por %p183, %p184
      %s186 = ssub.s32 %s16, %s23
      %p187 = scmp.eq.s32.totalorder %s186, 0
      %s189 = sadd.s32 %s188, 1
      %s190 = scalar_select %p187, %s188, %s189
      %p193 = pneg %p187
      %p194 = scmp.eq.s32.totalorder %s16, 1
      %p195 = por %p193, %p194
      %p196 = scmp.ne.s32.totalorder %s188, %s191
      %p197 = scmp.eq.s32.totalorder %s16, 0
      %p198 = por %p196, %p197
      %p199 = scmp.ne.s32.totalorder %s188, %s191
      %p200 = scmp.eq.s32.totalorder %s21, 1
      %p201 = por %p199, %p200
      %p202 = scmp.ne.s32.totalorder %s191, %s192
      %p203 = scmp.eq.s32.totalorder %s21, 0
      %p204 = por %p202, %p203
      %p205 = scmp.ne.s32.totalorder %s191, %s192
      %p206 = scmp.eq.s32.totalorder %s22, 1
      %p207 = por %p205, %p206
      %p209 = scmp.ne.s32.totalorder %s192, %s208
      %p210 = scmp.eq.s32.totalorder %s22, 0
      %p211 = por %p209, %p210
      %p212 = scmp.le.s32.totalorder 1, %s16
      %p213 = scmp.lt.s32.totalorder %s16, 3
      %p214 = pnand %p212, %p213
      %p215 = pneg %p214
      // Predicated region
      $region9: #{tpu_custom_call.1} parent=5 // pred_check
        _
      $region10: #{tpu_custom_call.1} parent=5 // pred_check_branch
        %217 = sbr.rel (%p214) target = $region12
      $region11: #{tpu_custom_call.1} parent=5 // pred_region
        %s218 = ssub.s32 %s16, 1
        // Predicated region
        $region13: #{tpu_custom_call.1} parent=11 // pred_check
          %p219 = pneg %p115
        $region14: #{tpu_custom_call.1} parent=11 // pred_check_branch
          %221 = sbr.rel (%p219) target = $region16
        $region15: #{tpu_custom_call.1} parent=11 // pred_region
          _
        $region16: #{tpu_custom_call.1} parent=11 // pred_fallthru
          _
        // Predicated region
        $region17: #{tpu_custom_call.1} parent=11 // pred_check
          %p222 = pneg %p136
        $region18: #{tpu_custom_call.1} parent=11 // pred_check_branch
          %224 = sbr.rel (%p222) target = $region20
        $region19: #{tpu_custom_call.1} parent=11 // pred_region
          _
        $region20: #{tpu_custom_call.1} parent=11 // pred_fallthru
          _
        // Predicated region
        $region21: #{tpu_custom_call.1} parent=11 // pred_check
          %p225 = pneg %p157
        $region22: #{tpu_custom_call.1} parent=11 // pred_check_branch
          %227 = sbr.rel (%p225) target = $region24
        $region23: #{tpu_custom_call.1} parent=11 // pred_region
          _
        $region24: #{tpu_custom_call.1} parent=11 // pred_fallthru
          _
        // Predicated region
        $region25: #{tpu_custom_call.1} parent=11 // pred_check
          %p228 = pneg %p178
        $region26: #{tpu_custom_call.1} parent=11 // pred_check_branch
          %230 = sbr.rel (%p228) target = $region28
        $region27: #{tpu_custom_call.1} parent=11 // pred_region
          _
        $region28: #{tpu_custom_call.1} parent=11 // pred_fallthru
          _
      $region12: #{tpu_custom_call.1} parent=5 // pred_fallthru
        _
      %p231 = scmp.lt.s32.totalorder %s16, 2
      // Predicated region
      $region29: #{tpu_custom_call.1} parent=5 // pred_check
        %p232 = pneg %p231
      $region30: #{tpu_custom_call.1} parent=5 // pred_check_branch
        %234 = sbr.rel (%p232) target = $region32
      $region31: #{tpu_custom_call.1} parent=5 // pred_region
        // Predicated region
        $region33: #{tpu_custom_call.1} parent=31 // pred_check
          %p235 = pneg %p36
        $region34: #{tpu_custom_call.1} parent=31 // pred_check_branch
          %237 = sbr.rel (%p235) target = $region36
        $region35: #{tpu_custom_call.1} parent=31 // pred_region
          %p238 = scmp.lt.s32.totalorder %s16, 1
          %s239 = scalar_select %p238, %s16, 1
          %s240 = smul.addr %s239, 8
          %s241 = scalar_lea.vmem %s0, %s240
        $region36: #{tpu_custom_call.1} parent=31 // pred_fallthru
          _
        // Predicated region
        $region37: #{tpu_custom_call.1} parent=31 // pred_check
          %p242 = pneg %p62
        $region38: #{tpu_custom_call.1} parent=31 // pred_check_branch
          %244 = sbr.rel (%p242) target = $region40
        $region39: #{tpu_custom_call.1} parent=31 // pred_region
          %s245 = smul.u32 8, %s16
          %p246 = scmp.lt.s32.totalorder %s245, 15
          %s247 = scalar_select %p246, %s245, 15
          %s248 = smul.addr %s247, 8
          %s249 = smul.addr %s248, 8
          %s250 = scalar_lea.vmem %s1, %s249
          %s251 = smul.u32 8, %s16
        $region40: #{tpu_custom_call.1} parent=31 // pred_fallthru
          _
        // Predicated region
        $region41: #{tpu_custom_call.1} parent=31 // pred_check
          %p252 = pneg %p88
        $region42: #{tpu_custom_call.1} parent=31 // pred_check_branch
          %254 = sbr.rel (%p252) target = $region44
        $region43: #{tpu_custom_call.1} parent=31 // pred_region
          %p255 = scmp.lt.s32.totalorder %s16, 1
          %s256 = scalar_select %p255, %s16, 1
          %s257 = smul.addr %s256, 8
          %s258 = scalar_lea.vmem %s2, %s257
        $region44: #{tpu_custom_call.1} parent=31 // pred_fallthru
          _
      $region32: #{tpu_custom_call.1} parent=5 // pred_fallthru
        _
      %p259 = scmp.le.s32.totalorder 1, %s16
      %p260 = scmp.lt.s32.totalorder %s16, 3
      %p261 = pnand %p259, %p260
      %p262 = pneg %p261
      // Predicated region
      $region45: #{tpu_custom_call.1} parent=5 // pred_check
        _
      $region46: #{tpu_custom_call.1} parent=5 // pred_check_branch
        %264 = sbr.rel (%p261) target = $region48
      $region47: #{tpu_custom_call.1} parent=5 // pred_region
        %s265 = ssub.s32 %s16, 1
        %p266 = scmp.lt.s32.totalorder %s21, 1
        %s267 = scalar_select %p266, %s21, 1
        %s268 = smul.addr %s267, 8
        %s269 = scalar_lea.vmem %s0, %s268
        %p270 = pneg %p42
        %p271 = pneg %p39
        %s272 = smul.u32 8, %s21
        %p273 = scmp.lt.s32.totalorder %s272, 15
        %s274 = scalar_select %p273, %s272, 15
        %s275 = smul.addr %s274, 8
        %s276 = smul.addr %s275, 8
        %s277 = scalar_lea.vmem %s1, %s276
        %p278 = pneg %p68
        %p279 = pneg %p65
        %p280 = scmp.lt.s32.totalorder %s21, 1
        %s281 = scalar_select %p280, %s21, 1
        %s282 = smul.addr %s281, 8
        %s283 = scalar_lea.vmem %s2, %s282
        %p284 = pneg %p94
        %p285 = pneg %p91
        %p286 = pneg %p115
        %p287 = pneg %p112
        %p288 = pneg %p136
        %p289 = pneg %p133
        %p290 = pneg %p157
        %p291 = pneg %p154
        %p292 = pneg %p178
        %p293 = pneg %p175
        %p294 = pneg %p204
        %p295 = pneg %p201
        %s296 = sand.u32 %s191, 1
        %s297 = scalar_lea.sflag [#allocation3], %s296
        %s298 = sand.u32 %s191, 1
        %s299 = smul.addr %s298, 8
        %s300 = scalar_lea.vmem [#allocation2], %s299
        %p301 = scmp.lt.s32.totalorder %s21, 1
        %s302 = scalar_select %p301, %s21, 1
        %s303 = smul.addr %s302, 8
        %s304 = scalar_lea.vmem %s0, %s303
        %s305 = smul.u32 8, %s21
        %p306 = scmp.lt.s32.totalorder %s305, 15
        %s307 = scalar_select %p306, %s305, 15
        %s308 = smul.addr %s307, 8
        %s309 = smul.addr %s308, 8
        %s310 = scalar_lea.vmem %s1, %s309
        %s311 = smul.u32 8, %s21
        %p312 = scmp.lt.s32.totalorder %s21, 1
        %s313 = scalar_select %p312, %s21, 1
        %s314 = smul.addr %s313, 8
        %s315 = scalar_lea.vmem %s2, %s314
        %v316 = vld [vmem:[%s304] sm:$0xff]
        %v317 = vld [vmem:[%s3] sm:$0xff]
        %v318 = vld [vmem:[%s3 + $0x8] sm:$0xff]
        %v319 = vld [vmem:[%s3 + $0x10] sm:$0xff]
        %v320 = vld [vmem:[%s3 + $0x18] sm:$0xff]
        %v321 = vld [vmem:[%s5] sm:$0x1]
        %v323 = vlaneseq
        %v324 = vshrl.u32 %v323, 7
        %v325 = vsub.s32 0, %v324
        %v326 = vrot.slane %v321, %v325
        %vm328 = vcmask 261120
        %v330 = vsel %vm328, %v316, 0
        %332 = vmatprep.subr.mxu0 0.0
        %333 = vmatpush1.msra.mxu0 %v317
        %334 = vmatprep.subr.mxu0 0.0
        %335 = vmatpush1.msra.mxu0 %v318
        %336 = vmatprep.subr.mxu0 0.0
        %337 = vmatpush1.msra.mxu0 %v319
        %338 = vmatprep.subr.mxu0 0.0
        %339 = vmatpush1.msra.mxu0 %v320
        %340 = vmatprep.subr.mxu0 0.0
        %341 = vmatpush1.msra.mxu0 0.0
        %342 = vmatprep.subr.mxu0 0.0
        %343 = vmatpush1.msra.mxu0 0.0
        %344 = vmatprep.subr.mxu0 0.0
        %345 = vmatpush1.msra.mxu0 0.0
        %346 = vmatprep.subr.mxu0 0.0
        %347 = vmatpush1.msra.mxu0 0.0
        %348 = vmatprep.subr.mxu0 0.0
        %349 = vmatpush1.msra.mxu0 0.0
        %350 = vmatprep.subr.mxu0 0.0
        %351 = vmatpush1.msra.mxu0 0.0
        %352 = vmatprep.subr.mxu0 0.0
        %353 = vmatpush1.msra.mxu0 0.0
        %354 = vmatprep.subr.mxu0 0.0
        %355 = vmatpush1.msra.mxu0 0.0
        %356 = vmatprep.subr.mxu0 0.0
        %357 = vmatpush1.msra.mxu0 0.0
        %358 = vmatprep.subr.mxu0 0.0
        %359 = vmatpush1.msra.mxu0 0.0
        %360 = vmatprep.subr.mxu0 0.0
        %361 = vmatpush1.msra.mxu0 0.0
        %362 = vmatprep.subr.mxu0 0.0
        %363 = vmatpush1.msra.mxu0 0.0
        %364 = vmatprep.subr.mxu0 0.0
        %365 = vmatpush1.msra.mxu0 0.0
        %366 = vmatprep.subr.mxu0 0.0
        %367 = vmatpush1.msra.mxu0 0.0
        %368 = vmatprep.subr.mxu0 0.0
        %369 = vmatpush1.msra.mxu0 0.0
        %370 = vmatprep.subr.mxu0 0.0
        %371 = vmatpush1.msra.mxu0 0.0
        %372 = vmatprep.subr.mxu0 0.0
        %373 = vmatpush1.msra.mxu0 0.0
        %374 = vmatprep.subr.mxu0 0.0
        %375 = vmatpush1.msra.mxu0 0.0
        %376 = vmatprep.subr.mxu0 0.0
        %377 = vmatpush1.msra.mxu0 0.0
        %378 = vmatprep.subr.mxu0 0.0
        %379 = vmatpush1.msra.mxu0 0.0
        %380 = vmatprep.subr.mxu0 0.0
        %381 = vmatpush1.msra.mxu0 0.0
        %382 = vmatprep.subr.mxu0 0.0
        %383 = vmatpush1.msra.mxu0 0.0
        %384 = vmatprep.subr.mxu0 0.0
        %385 = vmatpush1.msra.mxu0 0.0
        %386 = vmatprep.subr.mxu0 0.0
        %387 = vmatpush1.msra.mxu0 0.0
        %388 = vmatprep.subr.mxu0 0.0
        %389 = vmatpush1.msra.mxu0 0.0
        %390 = vmatprep.subr.mxu0 0.0
        %391 = vmatpush1.msra.mxu0 0.0
        %392 = vmatprep.subr.mxu0 0.0
        %393 = vmatpush1.msra.mxu0 0.0
        %394 = vmatprep.subr.mxu0 0.0
        %395 = vmatpush1.msra.mxu0 0.0
        %396 = vmatprep.mubr.f32.mxu0 0.0
        %397 = vmatmul.mubr.f32.gmra.mrb[0].mxu0 %v330
        %v398 = vpop.f32.mrb[0].mxu0
        %v399 = vadd.f32 %v326, %v398
        %v400 = vpop.f32.mrb[0].mxu0
        %401 = vdwg.mxu0
        %v402 = vld [vmem:[%s310] sm:$0xff]
        %v403 = vld [vmem:[%s310 + $0x8] sm:$0xff]
        %v404 = vld [vmem:[%s310 + $0x10] sm:$0xff]
        %v405 = vld [vmem:[%s310 + $0x18] sm:$0xff]
        %v406 = vld [vmem:[%s310 + $0x20] sm:$0xff]
        %v407 = vld [vmem:[%s310 + $0x28] sm:$0xff]
        %v408 = vld [vmem:[%s310 + $0x30] sm:$0xff]
        %v409 = vld [vmem:[%s310 + $0x38] sm:$0xff]
        %v410 = vld [vmem:[%s310 + $0x40] sm:$0xff]
        %v411 = vld [vmem:[%s310 + $0x48] sm:$0xff]
        %v412 = vld [vmem:[%s310 + $0x50] sm:$0xff]
        %v413 = vld [vmem:[%s310 + $0x58] sm:$0xff]
        %v414 = vld [vmem:[%s310 + $0x60] sm:$0xff]
        %v415 = vld [vmem:[%s310 + $0x68] sm:$0xff]
        %v416 = vld [vmem:[%s310 + $0x70] sm:$0xff]
        %v417 = vld [vmem:[%s310 + $0x78] sm:$0xff]
        %v418 = vld [vmem:[%s310 + $0x80] sm:$0xff]
        %v419 = vld [vmem:[%s310 + $0x88] sm:$0xff]
        %v420 = vld [vmem:[%s310 + $0x90] sm:$0xff]
        %v421 = vld [vmem:[%s310 + $0x98] sm:$0xff]
        %v422 = vld [vmem:[%s310 + $0xa0] sm:$0xff]
        %v423 = vld [vmem:[%s310 + $0xa8] sm:$0xff]
        %v424 = vld [vmem:[%s310 + $0xb0] sm:$0xff]
        %v425 = vld [vmem:[%s310 + $0xb8] sm:$0xff]
        %v426 = vld [vmem:[%s310 + $0xc0] sm:$0xff]
        %v427 = vld [vmem:[%s310 + $0xc8] sm:$0xff]
        %v428 = vld [vmem:[%s310 + $0xd0] sm:$0xff]
        %v429 = vld [vmem:[%s310 + $0xd8] sm:$0xff]
        %v430 = vld [vmem:[%s310 + $0xe0] sm:$0xff]
        %v431 = vld [vmem:[%s310 + $0xe8] sm:$0xff]
        %v432 = vld [vmem:[%s310 + $0xf0] sm:$0xff]
        %v433 = vld [vmem:[%s310 + $0xf8] sm:$0xff]
        %v434 = vld [vmem:[%s310 + $0x100] sm:$0xff]
        %v435 = vld [vmem:[%s310 + $0x108] sm:$0xff]
        %v436 = vld [vmem:[%s310 + $0x110] sm:$0xff]
        %v437 = vld [vmem:[%s310 + $0x118] sm:$0xff]
        %v438 = vld [vmem:[%s310 + $0x120] sm:$0xff]
        %v439 = vld [vmem:[%s310 + $0x128] sm:$0xff]
        %v440 = vld [vmem:[%s310 + $0x130] sm:$0xff]
        %v441 = vld [vmem:[%s310 + $0x138] sm:$0xff]
        %v442 = vld [vmem:[%s310 + $0x140] sm:$0xff]
        %v443 = vld [vmem:[%s310 + $0x148] sm:$0xff]
        %v444 = vld [vmem:[%s310 + $0x150] sm:$0xff]
        %v445 = vld [vmem:[%s310 + $0x158] sm:$0xff]
        %v446 = vld [vmem:[%s310 + $0x160] sm:$0xff]
        %v447 = vld [vmem:[%s310 + $0x168] sm:$0xff]
        %v448 = vld [vmem:[%s310 + $0x170] sm:$0xff]
        %v449 = vld [vmem:[%s310 + $0x178] sm:$0xff]
        %v450 = vld [vmem:[%s310 + $0x180] sm:$0xff]
        %v451 = vld [vmem:[%s310 + $0x188] sm:$0xff]
        %v452 = vld [vmem:[%s310 + $0x190] sm:$0xff]
        %v453 = vld [vmem:[%s310 + $0x198] sm:$0xff]
        %v454 = vld [vmem:[%s310 + $0x1a0] sm:$0xff]
        %v455 = vld [vmem:[%s310 + $0x1a8] sm:$0xff]
        %v456 = vld [vmem:[%s310 + $0x1b0] sm:$0xff]
        %v457 = vld [vmem:[%s310 + $0x1b8] sm:$0xff]
        %v458 = vld [vmem:[%s310 + $0x1c0] sm:$0xff]
        %v459 = vld [vmem:[%s310 + $0x1c8] sm:$0xff]
        %v460 = vld [vmem:[%s310 + $0x1d0] sm:$0xff]
        %v461 = vld [vmem:[%s310 + $0x1d8] sm:$0xff]
        %v462 = vld [vmem:[%s310 + $0x1e0] sm:$0xff]
        %v463 = vld [vmem:[%s310 + $0x1e8] sm:$0xff]
        %v464 = vld [vmem:[%s310 + $0x1f0] sm:$0xff]
        %v465 = vld [vmem:[%s310 + $0x1f8] sm:$0xff]
        %v466 = vld [vmem:[%s4] sm:$0xff]
        %v467 = vld [vmem:[%s4 + $0x8] sm:$0xff]
        %v468 = vld [vmem:[%s4 + $0x10] sm:$0xff]
        %v469 = vld [vmem:[%s4 + $0x18] sm:$0xff]
        %v471 = vsel %vm328, %v402, 0
        %v474 = vsel %vm328, %v403, 0
        %v477 = vsel %vm328, %v404, 0
        %v480 = vsel %vm328, %v405, 0
        %v483 = vsel %vm328, %v406, 0
        %v486 = vsel %vm328, %v407, 0
        %v489 = vsel %vm328, %v408, 0
        %v492 = vsel %vm328, %v409, 0
        %v495 = vsel %vm328, %v410, 0
        %v498 = vsel %vm328, %v411, 0
        %v501 = vsel %vm328, %v412, 0
        %v504 = vsel %vm328, %v413, 0
        %v507 = vsel %vm328, %v414, 0
        %v510 = vsel %vm328, %v415, 0
        %v513 = vsel %vm328, %v416, 0
        %v516 = vsel %vm328, %v417, 0
        %v519 = vsel %vm328, %v418, 0
        %v522 = vsel %vm328, %v419, 0
        %v525 = vsel %vm328, %v420, 0
        %v528 = vsel %vm328, %v421, 0
        %v531 = vsel %vm328, %v422, 0
        %v534 = vsel %vm328, %v423, 0
        %v537 = vsel %vm328, %v424, 0
        %v540 = vsel %vm328, %v425, 0
        %v543 = vsel %vm328, %v426, 0
        %v546 = vsel %vm328, %v427, 0
        %v549 = vsel %vm328, %v428, 0
        %v552 = vsel %vm328, %v429, 0
        %v555 = vsel %vm328, %v430, 0
        %v558 = vsel %vm328, %v431, 0
        %v561 = vsel %vm328, %v432, 0
        %v564 = vsel %vm328, %v433, 0
        %v567 = vsel %vm328, %v434, 0
        %v570 = vsel %vm328, %v435, 0
        %v573 = vsel %vm328, %v436, 0
        %v576 = vsel %vm328, %v437, 0
        %v579 = vsel %vm328, %v438, 0
        %v582 = vsel %vm328, %v439, 0
        %v585 = vsel %vm328, %v440, 0
        %v588 = vsel %vm328, %v441, 0
        %v591 = vsel %vm328, %v442, 0
        %v594 = vsel %vm328, %v443, 0
        %v597 = vsel %vm328, %v444, 0
        %v600 = vsel %vm328, %v445, 0
        %v603 = vsel %vm328, %v446, 0
        %v606 = vsel %vm328, %v447, 0
        %v609 = vsel %vm328, %v448, 0
        %v612 = vsel %vm328, %v449, 0
        %v615 = vsel %vm328, %v450, 0
        %v618 = vsel %vm328, %v451, 0
        %v621 = vsel %vm328, %v452, 0
        %v624 = vsel %vm328, %v453, 0
        %v627 = vsel %vm328, %v454, 0
        %v630 = vsel %vm328, %v455, 0
        %v633 = vsel %vm328, %v456, 0
        %v636 = vsel %vm328, %v457, 0
        %v639 = vsel %vm328, %v458, 0
        %v642 = vsel %vm328, %v459, 0
        %v645 = vsel %vm328, %v460, 0
        %v648 = vsel %vm328, %v461, 0
        %v651 = vsel %vm328, %v462, 0
        %v654 = vsel %vm328, %v463, 0
        %v657 = vsel %vm328, %v464, 0
        %v660 = vsel %vm328, %v465, 0
        %662 = vmatprep.subr.mxu0 0.0
        %663 = vmatpush1.msra.mxu0 %v466
        %664 = vmatprep.subr.mxu0 0.0
        %665 = vmatpush1.msra.mxu0 %v467
        %666 = vmatprep.subr.mxu0 0.0
        %667 = vmatpush1.msra.mxu0 %v468
        %668 = vmatprep.subr.mxu0 0.0
        %669 = vmatpush1.msra.mxu0 %v469
        %670 = vmatprep.subr.mxu0 0.0
        %671 = vmatpush1.msra.mxu0 0.0
        %672 = vmatprep.subr.mxu0 0.0
        %673 = vmatpush1.msra.mxu0 0.0
        %674 = vmatprep.subr.mxu0 0.0
        %675 = vmatpush1.msra.mxu0 0.0
        %676 = vmatprep.subr.mxu0 0.0
        %677 = vmatpush1.msra.mxu0 0.0
        %678 = vmatprep.subr.mxu0 0.0
        %679 = vmatpush1.msra.mxu0 0.0
        %680 = vmatprep.subr.mxu0 0.0
        %681 = vmatpush1.msra.mxu0 0.0
        %682 = vmatprep.subr.mxu0 0.0
        %683 = vmatpush1.msra.mxu0 0.0
        %684 = vmatprep.subr.mxu0 0.0
        %685 = vmatpush1.msra.mxu0 0.0
        %686 = vmatprep.subr.mxu0 0.0
        %687 = vmatpush1.msra.mxu0 0.0
        %688 = vmatprep.subr.mxu0 0.0
        %689 = vmatpush1.msra.mxu0 0.0
        %690 = vmatprep.subr.mxu0 0.0
        %691 = vmatpush1.msra.mxu0 0.0
        %692 = vmatprep.subr.mxu0 0.0
        %693 = vmatpush1.msra.mxu0 0.0
        %694 = vmatprep.subr.mxu0 0.0
        %695 = vmatpush1.msra.mxu0 0.0
        %696 = vmatprep.subr.mxu0 0.0
        %697 = vmatpush1.msra.mxu0 0.0
        %698 = vmatprep.subr.mxu0 0.0
        %699 = vmatpush1.msra.mxu0 0.0
        %700 = vmatprep.subr.mxu0 0.0
        %701 = vmatpush1.msra.mxu0 0.0
        %702 = vmatprep.subr.mxu0 0.0
        %703 = vmatpush1.msra.mxu0 0.0
        %704 = vmatprep.subr.mxu0 0.0
        %705 = vmatpush1.msra.mxu0 0.0
        %706 = vmatprep.subr.mxu0 0.0
        %707 = vmatpush1.msra.mxu0 0.0
        %708 = vmatprep.subr.mxu0 0.0
        %709 = vmatpush1.msra.mxu0 0.0
        %710 = vmatprep.subr.mxu0 0.0
        %711 = vmatpush1.msra.mxu0 0.0
        %712 = vmatprep.subr.mxu0 0.0
        %713 = vmatpush1.msra.mxu0 0.0
        %714 = vmatprep.subr.mxu0 0.0
        %715 = vmatpush1.msra.mxu0 0.0
        %716 = vmatprep.subr.mxu0 0.0
        %717 = vmatpush1.msra.mxu0 0.0
        %718 = vmatprep.subr.mxu0 0.0
        %719 = vmatpush1.msra.mxu0 0.0
        %720 = vmatprep.subr.mxu0 0.0
        %721 = vmatpush1.msra.mxu0 0.0
        %722 = vmatprep.subr.mxu0 0.0
        %723 = vmatpush1.msra.mxu0 0.0
        %724 = vmatprep.subr.mxu0 0.0
        %725 = vmatpush1.msra.mxu0 0.0
        %726 = vmatprep.mubr.f32.mxu0 0.0
        %727 = vmatmul.mubr.f32.gmra.mrb[0].mxu0 %v471
        %v728 = vpop.f32.mrb[0].mxu0
        %v729 = vadd.f32 0.0, %v728
        %v730 = vpop.f32.mrb[0].mxu0
        %731 = vmatprep.mubr.f32.mxu0 0.0
        %732 = vmatmul.mubr.f32.gmra.mrb[0].mxu0 %v474
        %v733 = vpop.f32.mrb[0].mxu0
        %v734 = vadd.f32 0.0, %v733
        %v735 = vpop.f32.mrb[0].mxu0
        %736 = vmatprep.mubr.f32.mxu0 0.0
        %737 = vmatmul.mubr.f32.gmra.mrb[0].mxu0 %v477
        %v738 = vpop.f32.mrb[0].mxu0
        %v739 = vadd.f32 0.0, %v738
        %v740 = vpop.f32.mrb[0].mxu0
        %741 = vmatprep.mubr.f32.mxu0 0.0
        %742 = vmatmul.mubr.f32.gmra.mrb[0].mxu0 %v480
        %v743 = vpop.f32.mrb[0].mxu0
        %v744 = vadd.f32 0.0, %v743
        %v745 = vpop.f32.mrb[0].mxu0
        %746 = vmatprep.mubr.f32.mxu0 0.0
        %747 = vmatmul.mubr.f32.gmra.mrb[0].mxu0 %v483
        %v748 = vpop.f32.mrb[0].mxu0
        %v749 = vadd.f32 0.0, %v748
        %v750 = vpop.f32.mrb[0].mxu0
        %751 = vmatprep.mubr.f32.mxu0 0.0
        %752 = vmatmul.mubr.f32.gmra.mrb[0].mxu0 %v486
        %v753 = vpop.f32.mrb[0].mxu0
        %v754 = vadd.f32 0.0, %v753
        %v755 = vpop.f32.mrb[0].mxu0
        %756 = vmatprep.mubr.f32.mxu0 0.0
        %757 = vmatmul.mubr.f32.gmra.mrb[0].mxu0 %v489
        %v758 = vpop.f32.mrb[0].mxu0
        %v759 = vadd.f32 0.0, %v758
        %v760 = vpop.f32.mrb[0].mxu0
        %761 = vmatprep.mubr.f32.mxu0 0.0
        %762 = vmatmul.mubr.f32.gmra.mrb[0].mxu0 %v492
        %v763 = vpop.f32.mrb[0].mxu0
        %v764 = vadd.f32 0.0, %v763
        %v765 = vpop.f32.mrb[0].mxu0
        %766 = vmatprep.mubr.f32.mxu0 0.0
        %767 = vmatmul.mubr.f32.gmra.mrb[0].mxu0 %v495
        %v768 = vpop.f32.mrb[0].mxu0
        %v769 = vadd.f32 0.0, %v768
        %v770 = vpop.f32.mrb[0].mxu0
        %771 = vmatprep.mubr.f32.mxu0 0.0
        %772 = vmatmul.mubr.f32.gmra.mrb[0].mxu0 %v498
        %v773 = vpop.f32.mrb[0].mxu0
        %v774 = vadd.f32 0.0, %v773
        %v775 = vpop.f32.mrb[0].mxu0
        %776 = vmatprep.mubr.f32.mxu0 0.0
        %777 = vmatmul.mubr.f32.gmra.mrb[0].mxu0 %v501
        %v778 = vpop.f32.mrb[0].mxu0
        %v779 = vadd.f32 0.0, %v778
        %v780 = vpop.f32.mrb[0].mxu0
        %781 = vmatprep.mubr.f32.mxu0 0.0
        %782 = vmatmul.mubr.f32.gmra.mrb[0].mxu0 %v504
        %v783 = vpop.f32.mrb[0].mxu0
        %v784 = vadd.f32 0.0, %v783
        %v785 = vpop.f32.mrb[0].mxu0
        %786 = vmatprep.mubr.f32.mxu0 0.0
        %787 = vmatmul.mubr.f32.gmra.mrb[0].mxu0 %v507
        %v788 = vpop.f32.mrb[0].mxu0
        %v789 = vadd.f32 0.0, %v788
        %v790 = vpop.f32.mrb[0].mxu0
        %791 = vmatprep.mubr.f32.mxu0 0.0
        %792 = vmatmul.mubr.f32.gmra.mrb[0].mxu0 %v510
        %v793 = vpop.f32.mrb[0].mxu0
        %v794 = vadd.f32 0.0, %v793
        %v795 = vpop.f32.mrb[0].mxu0
        %796 = vmatprep.mubr.f32.mxu0 0.0
        %797 = vmatmul.mubr.f32.gmra.mrb[0].mxu0 %v513
        %v798 = vpop.f32.mrb[0].mxu0
        %v799 = vadd.f32 0.0, %v798
        %v800 = vpop.f32.mrb[0].mxu0
        %801 = vmatprep.mubr.f32.mxu0 0.0
        %802 = vmatmul.mubr.f32.gmra.mrb[0].mxu0 %v516
        %v803 = vpop.f32.mrb[0].mxu0
        %v804 = vadd.f32 0.0, %v803
        %v805 = vpop.f32.mrb[0].mxu0
        %806 = vmatprep.mubr.f32.mxu0 0.0
        %807 = vmatmul.mubr.f32.gmra.mrb[0].mxu0 %v519
        %v808 = vpop.f32.mrb[0].mxu0
        %v809 = vadd.f32 0.0, %v808
        %v810 = vpop.f32.mrb[0].mxu0
        %811 = vmatprep.mubr.f32.mxu0 0.0
        %812 = vmatmul.mubr.f32.gmra.mrb[0].mxu0 %v522
        %v813 = vpop.f32.mrb[0].mxu0
        %v814 = vadd.f32 0.0, %v813
        %v815 = vpop.f32.mrb[0].mxu0
        %816 = vmatprep.mubr.f32.mxu0 0.0
        %817 = vmatmul.mubr.f32.gmra.mrb[0].mxu0 %v525
        %v818 = vpop.f32.mrb[0].mxu0
        %v819 = vadd.f32 0.0, %v818
        %v820 = vpop.f32.mrb[0].mxu0
        %821 = vmatprep.mubr.f32.mxu0 0.0
        %822 = vmatmul.mubr.f32.gmra.mrb[0].mxu0 %v528
        %v823 = vpop.f32.mrb[0].mxu0
        %v824 = vadd.f32 0.0, %v823
        %v825 = vpop.f32.mrb[0].mxu0
        %826 = vmatprep.mubr.f32.mxu0 0.0
        %827 = vmatmul.mubr.f32.gmra.mrb[0].mxu0 %v531
        %v828 = vpop.f32.mrb[0].mxu0
        %v829 = vadd.f32 0.0, %v828
        %v830 = vpop.f32.mrb[0].mxu0
        %831 = vmatprep.mubr.f32.mxu0 0.0
        %832 = vmatmul.mubr.f32.gmra.mrb[0].mxu0 %v534
        %v833 = vpop.f32.mrb[0].mxu0
        %v834 = vadd.f32 0.0, %v833
        %v835 = vpop.f32.mrb[0].mxu0
        %836 = vmatprep.mubr.f32.mxu0 0.0
        %837 = vmatmul.mubr.f32.gmra.mrb[0].mxu0 %v537
        %v838 = vpop.f32.mrb[0].mxu0
        %v839 = vadd.f32 0.0, %v838
        %v840 = vpop.f32.mrb[0].mxu0
        %841 = vmatprep.mubr.f32.mxu0 0.0
        %842 = vmatmul.mubr.f32.gmra.mrb[0].mxu0 %v540
        %v843 = vpop.f32.mrb[0].mxu0
        %v844 = vadd.f32 0.0, %v843
        %v845 = vpop.f32.mrb[0].mxu0
        %846 = vmatprep.mubr.f32.mxu0 0.0
        %847 = vmatmul.mubr.f32.gmra.mrb[0].mxu0 %v543
        %v848 = vpop.f32.mrb[0].mxu0
        %v849 = vadd.f32 0.0, %v848
        %v850 = vpop.f32.mrb[0].mxu0
        %851 = vmatprep.mubr.f32.mxu0 0.0
        %852 = vmatmul.mubr.f32.gmra.mrb[0].mxu0 %v546
        %v853 = vpop.f32.mrb[0].mxu0
        %v854 = vadd.f32 0.0, %v853
        %v855 = vpop.f32.mrb[0].mxu0
        %856 = vmatprep.mubr.f32.mxu0 0.0
        %857 = vmatmul.mubr.f32.gmra.mrb[0].mxu0 %v549
        %v858 = vpop.f32.mrb[0].mxu0
        %v859 = vadd.f32 0.0, %v858
        %v860 = vpop.f32.mrb[0].mxu0
        %861 = vmatprep.mubr.f32.mxu0 0.0
        %862 = vmatmul.mubr.f32.gmra.mrb[0].mxu0 %v552
        %v863 = vpop.f32.mrb[0].mxu0
        %v864 = vadd.f32 0.0, %v863
        %v865 = vpop.f32.mrb[0].mxu0
        %866 = vmatprep.mubr.f32.mxu0 0.0
        %867 = vmatmul.mubr.f32.gmra.mrb[0].mxu0 %v555
        %v868 = vpop.f32.mrb[0].mxu0
        %v869 = vadd.f32 0.0, %v868
        %v870 = vpop.f32.mrb[0].mxu0
        %871 = vmatprep.mubr.f32.mxu0 0.0
        %872 = vmatmul.mubr.f32.gmra.mrb[0].mxu0 %v558
        %v873 = vpop.f32.mrb[0].mxu0
        %v874 = vadd.f32 0.0, %v873
        %v875 = vpop.f32.mrb[0].mxu0
        %876 = vmatprep.mubr.f32.mxu0 0.0
        %877 = vmatmul.mubr.f32.gmra.mrb[0].mxu0 %v561
        %v878 = vpop.f32.mrb[0].mxu0
        %v879 = vadd.f32 0.0, %v878
        %v880 = vpop.f32.mrb[0].mxu0
        %881 = vmatprep.mubr.f32.mxu0 0.0
        %882 = vmatmul.mubr.f32.gmra.mrb[0].mxu0 %v564
        %v883 = vpop.f32.mrb[0].mxu0
        %v884 = vadd.f32 0.0, %v883
        %v885 = vpop.f32.mrb[0].mxu0
        %886 = vmatprep.mubr.f32.mxu0 0.0
        %887 = vmatmul.mubr.f32.gmra.mrb[0].mxu0 %v567
        %v888 = vpop.f32.mrb[0].mxu0
        %v889 = vadd.f32 0.0, %v888
        %v890 = vpop.f32.mrb[0].mxu0
        %891 = vmatprep.mubr.f32.mxu0 0.0
        %892 = vmatmul.mubr.f32.gmra.mrb[0].mxu0 %v570
        %v893 = vpop.f32.mrb[0].mxu0
        %v894 = vadd.f32 0.0, %v893
        %v895 = vpop.f32.mrb[0].mxu0
        %896 = vmatprep.mubr.f32.mxu0 0.0
        %897 = vmatmul.mubr.f32.gmra.mrb[0].mxu0 %v573
        %v898 = vpop.f32.mrb[0].mxu0
        %v899 = vadd.f32 0.0, %v898
        %v900 = vpop.f32.mrb[0].mxu0
        %901 = vmatprep.mubr.f32.mxu0 0.0
        %902 = vmatmul.mubr.f32.gmra.mrb[0].mxu0 %v576
        %v903 = vpop.f32.mrb[0].mxu0
        %v904 = vadd.f32 0.0, %v903
        %v905 = vpop.f32.mrb[0].mxu0
        %906 = vmatprep.mubr.f32.mxu0 0.0
        %907 = vmatmul.mubr.f32.gmra.mrb[0].mxu0 %v579
        %v908 = vpop.f32.mrb[0].mxu0
        %v909 = vadd.f32 0.0, %v908
        %v910 = vpop.f32.mrb[0].mxu0
        %911 = vmatprep.mubr.f32.mxu0 0.0
        %912 = vmatmul.mubr.f32.gmra.mrb[0].mxu0 %v582
        %v913 = vpop.f32.mrb[0].mxu0
        %v914 = vadd.f32 0.0, %v913
        %v915 = vpop.f32.mrb[0].mxu0
        %916 = vmatprep.mubr.f32.mxu0 0.0
        %917 = vmatmul.mubr.f32.gmra.mrb[0].mxu0 %v585
        %v918 = vpop.f32.mrb[0].mxu0
        %v919 = vadd.f32 0.0, %v918
        %v920 = vpop.f32.mrb[0].mxu0
        %921 = vmatprep.mubr.f32.mxu0 0.0
        %922 = vmatmul.mubr.f32.gmra.mrb[0].mxu0 %v588
        %v923 = vpop.f32.mrb[0].mxu0
        %v924 = vadd.f32 0.0, %v923
        %v925 = vpop.f32.mrb[0].mxu0
        %926 = vmatprep.mubr.f32.mxu0 0.0
        %927 = vmatmul.mubr.f32.gmra.mrb[0].mxu0 %v591
        %v928 = vpop.f32.mrb[0].mxu0
        %v929 = vadd.f32 0.0, %v928
        %v930 = vpop.f32.mrb[0].mxu0
        %931 = vmatprep.mubr.f32.mxu0 0.0
        %932 = vmatmul.mubr.f32.gmra.mrb[0].mxu0 %v594
        %v933 = vpop.f32.mrb[0].mxu0
        %v934 = vadd.f32 0.0, %v933
        %v935 = vpop.f32.mrb[0].mxu0
        %936 = vmatprep.mubr.f32.mxu0 0.0
        %937 = vmatmul.mubr.f32.gmra.mrb[0].mxu0 %v597
        %v938 = vpop.f32.mrb[0].mxu0
        %v939 = vadd.f32 0.0, %v938
        %v940 = vpop.f32.mrb[0].mxu0
        %941 = vmatprep.mubr.f32.mxu0 0.0
        %942 = vmatmul.mubr.f32.gmra.mrb[0].mxu0 %v600
        %v943 = vpop.f32.mrb[0].mxu0
        %v944 = vadd.f32 0.0, %v943
        %v945 = vpop.f32.mrb[0].mxu0
        %946 = vmatprep.mubr.f32.mxu0 0.0
        %947 = vmatmul.mubr.f32.gmra.mrb[0].mxu0 %v603
        %v948 = vpop.f32.mrb[0].mxu0
        %v949 = vadd.f32 0.0, %v948
        %v950 = vpop.f32.mrb[0].mxu0
        %951 = vmatprep.mubr.f32.mxu0 0.0
        %952 = vmatmul.mubr.f32.gmra.mrb[0].mxu0 %v606
        %v953 = vpop.f32.mrb[0].mxu0
        %v954 = vadd.f32 0.0, %v953
        %v955 = vpop.f32.mrb[0].mxu0
        %956 = vmatprep.mubr.f32.mxu0 0.0
        %957 = vmatmul.mubr.f32.gmra.mrb[0].mxu0 %v609
        %v958 = vpop.f32.mrb[0].mxu0
        %v959 = vadd.f32 0.0, %v958
        %v960 = vpop.f32.mrb[0].mxu0
        %961 = vmatprep.mubr.f32.mxu0 0.0
        %962 = vmatmul.mubr.f32.gmra.mrb[0].mxu0 %v612
        %v963 = vpop.f32.mrb[0].mxu0
        %v964 = vadd.f32 0.0, %v963
        %v965 = vpop.f32.mrb[0].mxu0
        %966 = vmatprep.mubr.f32.mxu0 0.0
        %967 = vmatmul.mubr.f32.gmra.mrb[0].mxu0 %v615
        %v968 = vpop.f32.mrb[0].mxu0
        %v969 = vadd.f32 0.0, %v968
        %v970 = vpop.f32.mrb[0].mxu0
        %971 = vmatprep.mubr.f32.mxu0 0.0
        %972 = vmatmul.mubr.f32.gmra.mrb[0].mxu0 %v618
        %v973 = vpop.f32.mrb[0].mxu0
        %v974 = vadd.f32 0.0, %v973
        %v975 = vpop.f32.mrb[0].mxu0
        %976 = vmatprep.mubr.f32.mxu0 0.0
        %977 = vmatmul.mubr.f32.gmra.mrb[0].mxu0 %v621
        %v978 = vpop.f32.mrb[0].mxu0
        %v979 = vadd.f32 0.0, %v978
        %v980 = vpop.f32.mrb[0].mxu0
        %981 = vmatprep.mubr.f32.mxu0 0.0
        %982 = vmatmul.mubr.f32.gmra.mrb[0].mxu0 %v624
        %v983 = vpop.f32.mrb[0].mxu0
        %v984 = vadd.f32 0.0, %v983
        %v985 = vpop.f32.mrb[0].mxu0
        %986 = vmatprep.mubr.f32.mxu0 0.0
        %987 = vmatmul.mubr.f32.gmra.mrb[0].mxu0 %v627
        %v988 = vpop.f32.mrb[0].mxu0
        %v989 = vadd.f32 0.0, %v988
        %v990 = vpop.f32.mrb[0].mxu0
        %991 = vmatprep.mubr.f32.mxu0 0.0
        %992 = vmatmul.mubr.f32.gmra.mrb[0].mxu0 %v630
        %v993 = vpop.f32.mrb[0].mxu0
        %v994 = vadd.f32 0.0, %v993
        %v995 = vpop.f32.mrb[0].mxu0
        %996 = vmatprep.mubr.f32.mxu0 0.0
        %997 = vmatmul.mubr.f32.gmra.mrb[0].mxu0 %v633
        %v998 = vpop.f32.mrb[0].mxu0
        %v999 = vadd.f32 0.0, %v998
        %v1000 = vpop.f32.mrb[0].mxu0
        %1001 = vmatprep.mubr.f32.mxu0 0.0
        %1002 = vmatmul.mubr.f32.gmra.mrb[0].mxu0 %v636
        %v1003 = vpop.f32.mrb[0].mxu0
        %v1004 = vadd.f32 0.0, %v1003
        %v1005 = vpop.f32.mrb[0].mxu0
        %1006 = vmatprep.mubr.f32.mxu0 0.0
        %1007 = vmatmul.mubr.f32.gmra.mrb[0].mxu0 %v639
        %v1008 = vpop.f32.mrb[0].mxu0
        %v1009 = vadd.f32 0.0, %v1008
        %v1010 = vpop.f32.mrb[0].mxu0
        %1011 = vmatprep.mubr.f32.mxu0 0.0
        %1012 = vmatmul.mubr.f32.gmra.mrb[0].mxu0 %v642
        %v1013 = vpop.f32.mrb[0].mxu0
        %v1014 = vadd.f32 0.0, %v1013
        %v1015 = vpop.f32.mrb[0].mxu0
        %1016 = vmatprep.mubr.f32.mxu0 0.0
        %1017 = vmatmul.mubr.f32.gmra.mrb[0].mxu0 %v645
        %v1018 = vpop.f32.mrb[0].mxu0
        %v1019 = vadd.f32 0.0, %v1018
        %v1020 = vpop.f32.mrb[0].mxu0
        %1021 = vmatprep.mubr.f32.mxu0 0.0
        %1022 = vmatmul.mubr.f32.gmra.mrb[0].mxu0 %v648
        %v1023 = vpop.f32.mrb[0].mxu0
        %v1024 = vadd.f32 0.0, %v1023
        %v1025 = vpop.f32.mrb[0].mxu0
        %1026 = vmatprep.mubr.f32.mxu0 0.0
        %1027 = vmatmul.mubr.f32.gmra.mrb[0].mxu0 %v651
        %v1028 = vpop.f32.mrb[0].mxu0
        %v1029 = vadd.f32 0.0, %v1028
        %v1030 = vpop.f32.mrb[0].mxu0
        %1031 = vmatprep.mubr.f32.mxu0 0.0
        %1032 = vmatmul.mubr.f32.gmra.mrb[0].mxu0 %v654
        %v1033 = vpop.f32.mrb[0].mxu0
        %v1034 = vadd.f32 0.0, %v1033
        %v1035 = vpop.f32.mrb[0].mxu0
        %1036 = vmatprep.mubr.f32.mxu0 0.0
        %1037 = vmatmul.mubr.f32.gmra.mrb[0].mxu0 %v657
        %v1038 = vpop.f32.mrb[0].mxu0
        %v1039 = vadd.f32 0.0, %v1038
        %v1040 = vpop.f32.mrb[0].mxu0
        %1041 = vmatprep.mubr.f32.mxu0 0.0
        %1042 = vmatmul.mubr.f32.gmra.mrb[0].mxu0 %v660
        %v1043 = vpop.f32.mrb[0].mxu0
        %v1044 = vadd.f32 0.0, %v1043
        %v1045 = vpop.f32.mrb[0].mxu0
        %1046 = vdwg.mxu0
        %v1048 = vcombine.high %v399, %v399
        %v1050 = vunpack.c.l.s4 1966171168
        %v1051 = vunpack.c.0.s8 %v1050
        %v1052 = vlaneseq
        %v1053 = vshrl.u32 %v1052, 7
        %v1054 = vsub.s32 %v1051, %v1053
        %v1055 = vrot.slane %v399, %v1054
        %v1057 = vunpack.c.l.s4 1966171168
        %v1058 = vunpack.c.0.s8 %v1057
        %v1059 = vlaneseq
        %v1060 = vshrl.u32 %v1059, 7
        %v1061 = vsub.s32 %v1058, %v1060
        %v1062 = vrot.slane %v1048, %v1061
        %v1063 = vcombine.high %v1055, %v1055
        %v1064 = vcombine.high %v1062, %v1062
        %v1066 = vunpack.c.l.s4 1966171168
        %v1067 = vunpack.c.0.s8 %v1066
        %v1068 = vlaneseq
        %v1069 = vshrl.u32 %v1068, 7
        %v1070 = vsub.s32 %v1067, %v1069
        %v1071 = vrot.slane %v1055, %v1070
        %v1073 = vunpack.c.l.s4 1966171168
        %v1074 = vunpack.c.0.s8 %v1073
        %v1075 = vlaneseq
        %v1076 = vshrl.u32 %v1075, 7
        %v1077 = vsub.s32 %v1074, %v1076
        %v1078 = vrot.slane %v1062, %v1077
        %v1080 = vunpack.c.l.s4 1966171168
        %v1081 = vunpack.c.0.s8 %v1080
        %v1082 = vlaneseq
        %v1083 = vshrl.u32 %v1082, 7
        %v1084 = vsub.s32 %v1081, %v1083
        %v1085 = vrot.slane %v1063, %v1084
        %v1087 = vunpack.c.l.s4 1966171168
        %v1088 = vunpack.c.0.s8 %v1087
        %v1089 = vlaneseq
        %v1090 = vshrl.u32 %v1089, 7
        %v1091 = vsub.s32 %v1088, %v1090
        %v1092 = vrot.slane %v1064, %v1091
        %v1093 = vcombine.high %v1071, %v1071
        %v1094 = vcombine.high %v1078, %v1078
        %v1095 = vcombine.high %v1085, %v1085
        %v1096 = vcombine.high %v1092, %v1092
        %v1097 = vlaneseq
        %v1098 = vshrl.u32 %v1097, 7
        %v1099 = vsub.s32 0, %v1098
        %v1100 = vrot.slane %v1071, %v1099
        %v1101 = vlaneseq
        %v1102 = vshrl.u32 %v1101, 7
        %v1103 = vsub.s32 0, %v1102
        %v1104 = vrot.slane %v1085, %v1103
        %v1105 = vlaneseq
        %v1106 = vshrl.u32 %v1105, 7
        %v1107 = vsub.s32 0, %v1106
        %v1108 = vrot.slane %v1093, %v1107
        %v1109 = vlaneseq
        %v1110 = vshrl.u32 %v1109, 7
        %v1111 = vsub.s32 0, %v1110
        %v1112 = vrot.slane %v1095, %v1111
        %v1113 = vlaneseq
        %v1114 = vshrl.u32 %v1113, 7
        %v1115 = vsub.s32 0, %v1114
        %v1116 = vrot.slane %v1078, %v1115
        %v1117 = vlaneseq
        %v1118 = vshrl.u32 %v1117, 7
        %v1119 = vsub.s32 0, %v1118
        %v1120 = vrot.slane %v1092, %v1119
        %v1121 = vlaneseq
        %v1122 = vshrl.u32 %v1121, 7
        %v1123 = vsub.s32 0, %v1122
        %v1124 = vrot.slane %v1094, %v1123
        %v1125 = vlaneseq
        %v1126 = vshrl.u32 %v1125, 7
        %v1127 = vsub.s32 0, %v1126
        %v1128 = vrot.slane %v1096, %v1127
        %v1137 = vadd.f32 %v729, %v1100
        %v1138 = vadd.f32 %v734, %v1100
        %v1139 = vadd.f32 %v739, %v1100
        %v1140 = vadd.f32 %v744, %v1100
        %v1141 = vadd.f32 %v749, %v1100
        %v1142 = vadd.f32 %v754, %v1100
        %v1143 = vadd.f32 %v759, %v1100
        %v1144 = vadd.f32 %v764, %v1100
        %v1145 = vadd.f32 %v769, %v1104
        %v1146 = vadd.f32 %v774, %v1104
        %v1147 = vadd.f32 %v779, %v1104
        %v1148 = vadd.f32 %v784, %v1104
        %v1149 = vadd.f32 %v789, %v1104
        %v1150 = vadd.f32 %v794, %v1104
        %v1151 = vadd.f32 %v799, %v1104
        %v1152 = vadd.f32 %v804, %v1104
        %v1153 = vadd.f32 %v809, %v1108
        %v1154 = vadd.f32 %v814, %v1108
        %v1155 = vadd.f32 %v819, %v1108
        %v1156 = vadd.f32 %v824, %v1108
        %v1157 = vadd.f32 %v829, %v1108
        %v1158 = vadd.f32 %v834, %v1108
        %v1159 = vadd.f32 %v839, %v1108
        %v1160 = vadd.f32 %v844, %v1108
        %v1161 = vadd.f32 %v849, %v1112
        %v1162 = vadd.f32 %v854, %v1112
        %v1163 = vadd.f32 %v859, %v1112
        %v1164 = vadd.f32 %v864, %v1112
        %v1165 = vadd.f32 %v869, %v1112
        %v1166 = vadd.f32 %v874, %v1112
        %v1167 = vadd.f32 %v879, %v1112
        %v1168 = vadd.f32 %v884, %v1112
        %v1169 = vadd.f32 %v889, %v1116
        %v1170 = vadd.f32 %v894, %v1116
        %v1171 = vadd.f32 %v899, %v1116
        %v1172 = vadd.f32 %v904, %v1116
        %v1173 = vadd.f32 %v909, %v1116
        %v1174 = vadd.f32 %v914, %v1116
        %v1175 = vadd.f32 %v919, %v1116
        %v1176 = vadd.f32 %v924, %v1116
        %v1177 = vadd.f32 %v929, %v1120
        %v1178 = vadd.f32 %v934, %v1120
        %v1179 = vadd.f32 %v939, %v1120
        %v1180 = vadd.f32 %v944, %v1120
        %v1181 = vadd.f32 %v949, %v1120
        %v1182 = vadd.f32 %v954, %v1120
        %v1183 = vadd.f32 %v959, %v1120
        %v1184 = vadd.f32 %v964, %v1120
        %v1185 = vadd.f32 %v969, %v1124
        %v1186 = vadd.f32 %v974, %v1124
        %v1187 = vadd.f32 %v979, %v1124
        %v1188 = vadd.f32 %v984, %v1124
        %v1189 = vadd.f32 %v989, %v1124
        %v1190 = vadd.f32 %v994, %v1124
        %v1191 = vadd.f32 %v999, %v1124
        %v1192 = vadd.f32 %v1004, %v1124
        %v1193 = vadd.f32 %v1009, %v1128
        %v1194 = vadd.f32 %v1014, %v1128
        %v1195 = vadd.f32 %v1019, %v1128
        %v1196 = vadd.f32 %v1024, %v1128
        %v1197 = vadd.f32 %v1029, %v1128
        %v1198 = vadd.f32 %v1034, %v1128
        %v1199 = vadd.f32 %v1039, %v1128
        %v1200 = vadd.f32 %v1044, %v1128
        %v1201 = vtanh.pop %v1137
        %v1202 = vtanh.pop %v1138
        %v1203 = vtanh.pop %v1139
        %v1204 = vtanh.pop %v1140
        %v1205 = vtanh.pop %v1141
        %v1206 = vtanh.pop %v1142
        %v1207 = vtanh.pop %v1143
        %v1208 = vtanh.pop %v1144
        %v1209 = vtanh.pop %v1145
        %v1210 = vtanh.pop %v1146
        %v1211 = vtanh.pop %v1147
        %v1212 = vtanh.pop %v1148
        %v1213 = vtanh.pop %v1149
        %v1214 = vtanh.pop %v1150
        %v1215 = vtanh.pop %v1151
        %v1216 = vtanh.pop %v1152
        %v1217 = vtanh.pop %v1153
        %v1218 = vtanh.pop %v1154
        %v1219 = vtanh.pop %v1155
        %v1220 = vtanh.pop %v1156
        %v1221 = vtanh.pop %v1157
        %v1222 = vtanh.pop %v1158
        %v1223 = vtanh.pop %v1159
        %v1224 = vtanh.pop %v1160
        %v1225 = vtanh.pop %v1161
        %v1226 = vtanh.pop %v1162
        %v1227 = vtanh.pop %v1163
        %v1228 = vtanh.pop %v1164
        %v1229 = vtanh.pop %v1165
        %v1230 = vtanh.pop %v1166
        %v1231 = vtanh.pop %v1167
        %v1232 = vtanh.pop %v1168
        %v1233 = vtanh.pop %v1169
        %v1234 = vtanh.pop %v1170
        %v1235 = vtanh.pop %v1171
        %v1236 = vtanh.pop %v1172
        %v1237 = vtanh.pop %v1173
        %v1238 = vtanh.pop %v1174
        %v1239 = vtanh.pop %v1175
        %v1240 = vtanh.pop %v1176
        %v1241 = vtanh.pop %v1177
        %v1242 = vtanh.pop %v1178
        %v1243 = vtanh.pop %v1179
        %v1244 = vtanh.pop %v1180
        %v1245 = vtanh.pop %v1181
        %v1246 = vtanh.pop %v1182
        %v1247 = vtanh.pop %v1183
        %v1248 = vtanh.pop %v1184
        %v1249 = vtanh.pop %v1185
        %v1250 = vtanh.pop %v1186
        %v1251 = vtanh.pop %v1187
        %v1252 = vtanh.pop %v1188
        %v1253 = vtanh.pop %v1189
        %v1254 = vtanh.pop %v1190
        %v1255 = vtanh.pop %v1191
        %v1256 = vtanh.pop %v1192
        %v1257 = vtanh.pop %v1193
        %v1258 = vtanh.pop %v1194
        %v1259 = vtanh.pop %v1195
        %v1260 = vtanh.pop %v1196
        %v1261 = vtanh.pop %v1197
        %v1262 = vtanh.pop %v1198
        %v1263 = vtanh.pop %v1199
        %v1264 = vtanh.pop %v1200
        %v1265 = vld [vmem:[%s6] sm:$0x1]
        %v1267 = vlaneseq
        %v1268 = vshrl.u32 %v1267, 7
        %v1269 = vsub.s32 0, %v1268
        %v1270 = vrot.slane %v1265, %v1269
        %v1272 = vmul.f32 %v1201, %v1270
        %v1273 = vmul.f32 %v1202, %v1270
        %v1274 = vmul.f32 %v1203, %v1270
        %v1275 = vmul.f32 %v1204, %v1270
        %v1276 = vmul.f32 %v1205, %v1270
        %v1277 = vmul.f32 %v1206, %v1270
        %v1278 = vmul.f32 %v1207, %v1270
        %v1279 = vmul.f32 %v1208, %v1270
        %v1280 = vmul.f32 %v1209, %v1270
        %v1281 = vmul.f32 %v1210, %v1270
        %v1282 = vmul.f32 %v1211, %v1270
        %v1283 = vmul.f32 %v1212, %v1270
        %v1284 = vmul.f32 %v1213, %v1270
        %v1285 = vmul.f32 %v1214, %v1270
        %v1286 = vmul.f32 %v1215, %v1270
        %v1287 = vmul.f32 %v1216, %v1270
        %v1288 = vmul.f32 %v1217, %v1270
        %v1289 = vmul.f32 %v1218, %v1270
        %v1290 = vmul.f32 %v1219, %v1270
        %v1291 = vmul.f32 %v1220, %v1270
        %v1292 = vmul.f32 %v1221, %v1270
        %v1293 = vmul.f32 %v1222, %v1270
        %v1294 = vmul.f32 %v1223, %v1270
        %v1295 = vmul.f32 %v1224, %v1270
        %v1296 = vmul.f32 %v1225, %v1270
        %v1297 = vmul.f32 %v1226, %v1270
        %v1298 = vmul.f32 %v1227, %v1270
        %v1299 = vmul.f32 %v1228, %v1270
        %v1300 = vmul.f32 %v1229, %v1270
        %v1301 = vmul.f32 %v1230, %v1270
        %v1302 = vmul.f32 %v1231, %v1270
        %v1303 = vmul.f32 %v1232, %v1270
        %v1304 = vmul.f32 %v1233, %v1270
        %v1305 = vmul.f32 %v1234, %v1270
        %v1306 = vmul.f32 %v1235, %v1270
        %v1307 = vmul.f32 %v1236, %v1270
        %v1308 = vmul.f32 %v1237, %v1270
        %v1309 = vmul.f32 %v1238, %v1270
        %v1310 = vmul.f32 %v1239, %v1270
        %v1311 = vmul.f32 %v1240, %v1270
        %v1312 = vmul.f32 %v1241, %v1270
        %v1313 = vmul.f32 %v1242, %v1270
        %v1314 = vmul.f32 %v1243, %v1270
        %v1315 = vmul.f32 %v1244, %v1270
        %v1316 = vmul.f32 %v1245, %v1270
        %v1317 = vmul.f32 %v1246, %v1270
        %v1318 = vmul.f32 %v1247, %v1270
        %v1319 = vmul.f32 %v1248, %v1270
        %v1320 = vmul.f32 %v1249, %v1270
        %v1321 = vmul.f32 %v1250, %v1270
        %v1322 = vmul.f32 %v1251, %v1270
        %v1323 = vmul.f32 %v1252, %v1270
        %v1324 = vmul.f32 %v1253, %v1270
        %v1325 = vmul.f32 %v1254, %v1270
        %v1326 = vmul.f32 %v1255, %v1270
        %v1327 = vmul.f32 %v1256, %v1270
        %v1328 = vmul.f32 %v1257, %v1270
        %v1329 = vmul.f32 %v1258, %v1270
        %v1330 = vmul.f32 %v1259, %v1270
        %v1331 = vmul.f32 %v1260, %v1270
        %v1332 = vmul.f32 %v1261, %v1270
        %v1333 = vmul.f32 %v1262, %v1270
        %v1334 = vmul.f32 %v1263, %v1270
        %v1335 = vmul.f32 %v1264, %v1270
        %v1336 = vsel %vm328, %v1272, 0.0
        %1337 = vadd.xlane.f32.xlu0 %v1336
        %v1338 = vpop.xlane.xlu0 %1337
        %v1339 = vsel %vm328, %v1273, 0.0
        %1340 = vadd.xlane.f32.xlu0 %v1339
        %v1341 = vpop.xlane.xlu0 %1340
        %v1342 = vsel %vm328, %v1274, 0.0
        %1343 = vadd.xlane.f32.xlu0 %v1342
        %v1344 = vpop.xlane.xlu0 %1343
        %v1345 = vsel %vm328, %v1275, 0.0
        %1346 = vadd.xlane.f32.xlu0 %v1345
        %v1347 = vpop.xlane.xlu0 %1346
        %v1348 = vsel %vm328, %v1276, 0.0
        %1349 = vadd.xlane.f32.xlu0 %v1348
        %v1350 = vpop.xlane.xlu0 %1349
        %v1351 = vsel %vm328, %v1277, 0.0
        %1352 = vadd.xlane.f32.xlu0 %v1351
        %v1353 = vpop.xlane.xlu0 %1352
        %v1354 = vsel %vm328, %v1278, 0.0
        %1355 = vadd.xlane.f32.xlu0 %v1354
        %v1356 = vpop.xlane.xlu0 %1355
        %v1357 = vsel %vm328, %v1279, 0.0
        %1358 = vadd.xlane.f32.xlu0 %v1357
        %v1359 = vpop.xlane.xlu0 %1358
        %v1360 = vsel %vm328, %v1280, 0.0
        %1361 = vadd.xlane.f32.xlu0 %v1360
        %v1362 = vpop.xlane.xlu0 %1361
        %v1363 = vsel %vm328, %v1281, 0.0
        %1364 = vadd.xlane.f32.xlu0 %v1363
        %v1365 = vpop.xlane.xlu0 %1364
        %v1366 = vsel %vm328, %v1282, 0.0
        %1367 = vadd.xlane.f32.xlu0 %v1366
        %v1368 = vpop.xlane.xlu0 %1367
        %v1369 = vsel %vm328, %v1283, 0.0
        %1370 = vadd.xlane.f32.xlu0 %v1369
        %v1371 = vpop.xlane.xlu0 %1370
        %v1372 = vsel %vm328, %v1284, 0.0
        %1373 = vadd.xlane.f32.xlu0 %v1372
        %v1374 = vpop.xlane.xlu0 %1373
        %v1375 = vsel %vm328, %v1285, 0.0
        %1376 = vadd.xlane.f32.xlu0 %v1375
        %v1377 = vpop.xlane.xlu0 %1376
        %v1378 = vsel %vm328, %v1286, 0.0
        %1379 = vadd.xlane.f32.xlu0 %v1378
        %v1380 = vpop.xlane.xlu0 %1379
        %v1381 = vsel %vm328, %v1287, 0.0
        %1382 = vadd.xlane.f32.xlu0 %v1381
        %v1383 = vpop.xlane.xlu0 %1382
        %v1384 = vsel %vm328, %v1288, 0.0
        %1385 = vadd.xlane.f32.xlu0 %v1384
        %v1386 = vpop.xlane.xlu0 %1385
        %v1387 = vsel %vm328, %v1289, 0.0
        %1388 = vadd.xlane.f32.xlu0 %v1387
        %v1389 = vpop.xlane.xlu0 %1388
        %v1390 = vsel %vm328, %v1290, 0.0
        %1391 = vadd.xlane.f32.xlu0 %v1390
        %v1392 = vpop.xlane.xlu0 %1391
        %v1393 = vsel %vm328, %v1291, 0.0
        %1394 = vadd.xlane.f32.xlu0 %v1393
        %v1395 = vpop.xlane.xlu0 %1394
        %v1396 = vsel %vm328, %v1292, 0.0
        %1397 = vadd.xlane.f32.xlu0 %v1396
        %v1398 = vpop.xlane.xlu0 %1397
        %v1399 = vsel %vm328, %v1293, 0.0
        %1400 = vadd.xlane.f32.xlu0 %v1399
        %v1401 = vpop.xlane.xlu0 %1400
        %v1402 = vsel %vm328, %v1294, 0.0
        %1403 = vadd.xlane.f32.xlu0 %v1402
        %v1404 = vpop.xlane.xlu0 %1403
        %v1405 = vsel %vm328, %v1295, 0.0
        %1406 = vadd.xlane.f32.xlu0 %v1405
        %v1407 = vpop.xlane.xlu0 %1406
        %v1408 = vsel %vm328, %v1296, 0.0
        %1409 = vadd.xlane.f32.xlu0 %v1408
        %v1410 = vpop.xlane.xlu0 %1409
        %v1411 = vsel %vm328, %v1297, 0.0
        %1412 = vadd.xlane.f32.xlu0 %v1411
        %v1413 = vpop.xlane.xlu0 %1412
        %v1414 = vsel %vm328, %v1298, 0.0
        %1415 = vadd.xlane.f32.xlu0 %v1414
        %v1416 = vpop.xlane.xlu0 %1415
        %v1417 = vsel %vm328, %v1299, 0.0
        %1418 = vadd.xlane.f32.xlu0 %v1417
        %v1419 = vpop.xlane.xlu0 %1418
        %v1420 = vsel %vm328, %v1300, 0.0
        %1421 = vadd.xlane.f32.xlu0 %v1420
        %v1422 = vpop.xlane.xlu0 %1421
        %v1423 = vsel %vm328, %v1301, 0.0
        %1424 = vadd.xlane.f32.xlu0 %v1423
        %v1425 = vpop.xlane.xlu0 %1424
        %v1426 = vsel %vm328, %v1302, 0.0
        %1427 = vadd.xlane.f32.xlu0 %v1426
        %v1428 = vpop.xlane.xlu0 %1427
        %v1429 = vsel %vm328, %v1303, 0.0
        %1430 = vadd.xlane.f32.xlu0 %v1429
        %v1431 = vpop.xlane.xlu0 %1430
        %v1432 = vsel %vm328, %v1304, 0.0
        %1433 = vadd.xlane.f32.xlu0 %v1432
        %v1434 = vpop.xlane.xlu0 %1433
        %v1435 = vsel %vm328, %v1305, 0.0
        %1436 = vadd.xlane.f32.xlu0 %v1435
        %v1437 = vpop.xlane.xlu0 %1436
        %v1438 = vsel %vm328, %v1306, 0.0
        %1439 = vadd.xlane.f32.xlu0 %v1438
        %v1440 = vpop.xlane.xlu0 %1439
        %v1441 = vsel %vm328, %v1307, 0.0
        %1442 = vadd.xlane.f32.xlu0 %v1441
        %v1443 = vpop.xlane.xlu0 %1442
        %v1444 = vsel %vm328, %v1308, 0.0
        %1445 = vadd.xlane.f32.xlu0 %v1444
        %v1446 = vpop.xlane.xlu0 %1445
        %v1447 = vsel %vm328, %v1309, 0.0
        %1448 = vadd.xlane.f32.xlu0 %v1447
        %v1449 = vpop.xlane.xlu0 %1448
        %v1450 = vsel %vm328, %v1310, 0.0
        %1451 = vadd.xlane.f32.xlu0 %v1450
        %v1452 = vpop.xlane.xlu0 %1451
        %v1453 = vsel %vm328, %v1311, 0.0
        %1454 = vadd.xlane.f32.xlu0 %v1453
        %v1455 = vpop.xlane.xlu0 %1454
        %v1456 = vsel %vm328, %v1312, 0.0
        %1457 = vadd.xlane.f32.xlu0 %v1456
        %v1458 = vpop.xlane.xlu0 %1457
        %v1459 = vsel %vm328, %v1313, 0.0
        %1460 = vadd.xlane.f32.xlu0 %v1459
        %v1461 = vpop.xlane.xlu0 %1460
        %v1462 = vsel %vm328, %v1314, 0.0
        %1463 = vadd.xlane.f32.xlu0 %v1462
        %v1464 = vpop.xlane.xlu0 %1463
        %v1465 = vsel %vm328, %v1315, 0.0
        %1466 = vadd.xlane.f32.xlu0 %v1465
        %v1467 = vpop.xlane.xlu0 %1466
        %v1468 = vsel %vm328, %v1316, 0.0
        %1469 = vadd.xlane.f32.xlu0 %v1468
        %v1470 = vpop.xlane.xlu0 %1469
        %v1471 = vsel %vm328, %v1317, 0.0
        %1472 = vadd.xlane.f32.xlu0 %v1471
        %v1473 = vpop.xlane.xlu0 %1472
        %v1474 = vsel %vm328, %v1318, 0.0
        %1475 = vadd.xlane.f32.xlu0 %v1474
        %v1476 = vpop.xlane.xlu0 %1475
        %v1477 = vsel %vm328, %v1319, 0.0
        %1478 = vadd.xlane.f32.xlu0 %v1477
        %v1479 = vpop.xlane.xlu0 %1478
        %v1480 = vsel %vm328, %v1320, 0.0
        %1481 = vadd.xlane.f32.xlu0 %v1480
        %v1482 = vpop.xlane.xlu0 %1481
        %v1483 = vsel %vm328, %v1321, 0.0
        %1484 = vadd.xlane.f32.xlu0 %v1483
        %v1485 = vpop.xlane.xlu0 %1484
        %v1486 = vsel %vm328, %v1322, 0.0
        %1487 = vadd.xlane.f32.xlu0 %v1486
        %v1488 = vpop.xlane.xlu0 %1487
        %v1489 = vsel %vm328, %v1323, 0.0
        %1490 = vadd.xlane.f32.xlu0 %v1489
        %v1491 = vpop.xlane.xlu0 %1490
        %v1492 = vsel %vm328, %v1324, 0.0
        %1493 = vadd.xlane.f32.xlu0 %v1492
        %v1494 = vpop.xlane.xlu0 %1493
        %v1495 = vsel %vm328, %v1325, 0.0
        %1496 = vadd.xlane.f32.xlu0 %v1495
        %v1497 = vpop.xlane.xlu0 %1496
        %v1498 = vsel %vm328, %v1326, 0.0
        %1499 = vadd.xlane.f32.xlu0 %v1498
        %v1500 = vpop.xlane.xlu0 %1499
        %v1501 = vsel %vm328, %v1327, 0.0
        %1502 = vadd.xlane.f32.xlu0 %v1501
        %v1503 = vpop.xlane.xlu0 %1502
        %v1504 = vsel %vm328, %v1328, 0.0
        %1505 = vadd.xlane.f32.xlu0 %v1504
        %v1506 = vpop.xlane.xlu0 %1505
        %v1507 = vsel %vm328, %v1329, 0.0
        %1508 = vadd.xlane.f32.xlu0 %v1507
        %v1509 = vpop.xlane.xlu0 %1508
        %v1510 = vsel %vm328, %v1330, 0.0
        %1511 = vadd.xlane.f32.xlu0 %v1510
        %v1512 = vpop.xlane.xlu0 %1511
        %v1513 = vsel %vm328, %v1331, 0.0
        %1514 = vadd.xlane.f32.xlu0 %v1513
        %v1515 = vpop.xlane.xlu0 %1514
        %v1516 = vsel %vm328, %v1332, 0.0
        %1517 = vadd.xlane.f32.xlu0 %v1516
        %v1518 = vpop.xlane.xlu0 %1517
        %v1519 = vsel %vm328, %v1333, 0.0
        %1520 = vadd.xlane.f32.xlu0 %v1519
        %v1521 = vpop.xlane.xlu0 %1520
        %v1522 = vsel %vm328, %v1334, 0.0
        %1523 = vadd.xlane.f32.xlu0 %v1522
        %v1524 = vpop.xlane.xlu0 %1523
        %v1525 = vsel %vm328, %v1335, 0.0
        %1526 = vadd.xlane.f32.xlu0 %v1525
        %v1527 = vpop.xlane.xlu0 %1526
        %v1528 = vld [vmem:[%s315] sm:$0xff]
        %vm1529 = vcmp.eq.f32.partialorder %v1528, 0.0
        %v1594 = vlaneseq
        %v1595 = vand.u32 %v1594, 127
        %v1596 = vlaneseq
        %v1597 = vshrl.u32 %v1596, 7
        %v1598 = vsub.s32 %v1595, %v1597
        %v1599 = vrot.slane %v1338, %v1598
        %v1600 = vadd.s32 %v1595, 4294967288
        %v1601 = vlaneseq
        %v1602 = vshrl.u32 %v1601, 7
        %v1603 = vsub.s32 %v1600, %v1602
        %v1604 = vrot.slane %v1341, %v1603
        %vm1605 = vcmask 130112
        %v1606 = vsel %vm1605, %v1604, %v1599
        %v1607 = vadd.s32 %v1595, 4294967280
        %v1608 = vlaneseq
        %v1609 = vshrl.u32 %v1608, 7
        %v1610 = vsub.s32 %v1607, %v1609
        %v1611 = vrot.slane %v1344, %v1610
        %vm1612 = vcmask 195712
        %v1613 = vsel %vm1612, %v1611, %v1606
        %v1614 = vadd.s32 %v1595, 4294967272
        %v1615 = vlaneseq
        %v1616 = vshrl.u32 %v1615, 7
        %v1617 = vsub.s32 %v1614, %v1616
        %v1618 = vrot.slane %v1347, %v1617
        %vm1619 = vcmask 261312
        %v1620 = vsel %vm1619, %v1618, %v1613
        %v1621 = vadd.s32 %v1595, 4294967264
        %v1622 = vlaneseq
        %v1623 = vshrl.u32 %v1622, 7
        %v1624 = vsub.s32 %v1621, %v1623
        %v1625 = vrot.slane %v1350, %v1624
        %vm1626 = vcmask 326912
        %v1627 = vsel %vm1626, %v1625, %v1620
        %v1628 = vadd.s32 %v1595, 4294967256
        %v1629 = vlaneseq
        %v1630 = vshrl.u32 %v1629, 7
        %v1631 = vsub.s32 %v1628, %v1630
        %v1632 = vrot.slane %v1353, %v1631
        %vm1633 = vcmask 392512
        %v1634 = vsel %vm1633, %v1632, %v1627
        %v1635 = vadd.s32 %v1595, 4294967248
        %v1636 = vlaneseq
        %v1637 = vshrl.u32 %v1636, 7
        %v1638 = vsub.s32 %v1635, %v1637
        %v1639 = vrot.slane %v1356, %v1638
        %vm1640 = vcmask 458112
        %v1641 = vsel %vm1640, %v1639, %v1634
        %v1642 = vadd.s32 %v1595, 4294967240
        %v1643 = vlaneseq
        %v1644 = vshrl.u32 %v1643, 7
        %v1645 = vsub.s32 %v1642, %v1644
        %v1646 = vrot.slane %v1359, %v1645
        %vm1647 = vcmask 523712
        %v1648 = vsel %vm1647, %v1646, %v1641
        %v1649 = vlaneseq
        %v1650 = vshrl.u32 %v1649, 7
        %v1651 = vsub.s32 %v1595, %v1650
        %v1652 = vrot.slane %v1362, %v1651
        %v1653 = vlaneseq
        %v1654 = vshrl.u32 %v1653, 7
        %v1655 = vsub.s32 %v1600, %v1654
        %v1656 = vrot.slane %v1365, %v1655
        %v1657 = vsel %vm1605, %v1656, %v1652
        %v1658 = vlaneseq
        %v1659 = vshrl.u32 %v1658, 7
        %v1660 = vsub.s32 %v1607, %v1659
        %v1661 = vrot.slane %v1368, %v1660
        %v1662 = vsel %vm1612, %v1661, %v1657
        %v1663 = vlaneseq
        %v1664 = vshrl.u32 %v1663, 7
        %v1665 = vsub.s32 %v1614, %v1664
        %v1666 = vrot.slane %v1371, %v1665
        %v1667 = vsel %vm1619, %v1666, %v1662
        %v1668 = vlaneseq
        %v1669 = vshrl.u32 %v1668, 7
        %v1670 = vsub.s32 %v1621, %v1669
        %v1671 = vrot.slane %v1374, %v1670
        %v1672 = vsel %vm1626, %v1671, %v1667
        %v1673 = vlaneseq
        %v1674 = vshrl.u32 %v1673, 7
        %v1675 = vsub.s32 %v1628, %v1674
        %v1676 = vrot.slane %v1377, %v1675
        %v1677 = vsel %vm1633, %v1676, %v1672
        %v1678 = vlaneseq
        %v1679 = vshrl.u32 %v1678, 7
        %v1680 = vsub.s32 %v1635, %v1679
        %v1681 = vrot.slane %v1380, %v1680
        %v1682 = vsel %vm1640, %v1681, %v1677
        %v1683 = vlaneseq
        %v1684 = vshrl.u32 %v1683, 7
        %v1685 = vsub.s32 %v1642, %v1684
        %v1686 = vrot.slane %v1383, %v1685
        %v1687 = vsel %vm1647, %v1686, %v1682
        %v1688 = vlaneseq
        %v1689 = vshrl.u32 %v1688, 7
        %v1690 = vsub.s32 %v1595, %v1689
        %v1691 = vrot.slane %v1386, %v1690
        %v1692 = vlaneseq
        %v1693 = vshrl.u32 %v1692, 7
        %v1694 = vsub.s32 %v1600, %v1693
        %v1695 = vrot.slane %v1389, %v1694
        %v1696 = vsel %vm1605, %v1695, %v1691
        %v1697 = vlaneseq
        %v1698 = vshrl.u32 %v1697, 7
        %v1699 = vsub.s32 %v1607, %v1698
        %v1700 = vrot.slane %v1392, %v1699
        %v1701 = vsel %vm1612, %v1700, %v1696
        %v1702 = vlaneseq
        %v1703 = vshrl.u32 %v1702, 7
        %v1704 = vsub.s32 %v1614, %v1703
        %v1705 = vrot.slane %v1395, %v1704
        %v1706 = vsel %vm1619, %v1705, %v1701
        %v1707 = vlaneseq
        %v1708 = vshrl.u32 %v1707, 7
        %v1709 = vsub.s32 %v1621, %v1708
        %v1710 = vrot.slane %v1398, %v1709
        %v1711 = vsel %vm1626, %v1710, %v1706
        %v1712 = vlaneseq
        %v1713 = vshrl.u32 %v1712, 7
        %v1714 = vsub.s32 %v1628, %v1713
        %v1715 = vrot.slane %v1401, %v1714
        %v1716 = vsel %vm1633, %v1715, %v1711
        %v1717 = vlaneseq
        %v1718 = vshrl.u32 %v1717, 7
        %v1719 = vsub.s32 %v1635, %v1718
        %v1720 = vrot.slane %v1404, %v1719
        %v1721 = vsel %vm1640, %v1720, %v1716
        %v1722 = vlaneseq
        %v1723 = vshrl.u32 %v1722, 7
        %v1724 = vsub.s32 %v1642, %v1723
        %v1725 = vrot.slane %v1407, %v1724
        %v1726 = vsel %vm1647, %v1725, %v1721
        %v1727 = vlaneseq
        %v1728 = vshrl.u32 %v1727, 7
        %v1729 = vsub.s32 %v1595, %v1728
        %v1730 = vrot.slane %v1410, %v1729
        %v1731 = vlaneseq
        %v1732 = vshrl.u32 %v1731, 7
        %v1733 = vsub.s32 %v1600, %v1732
        %v1734 = vrot.slane %v1413, %v1733
        %v1735 = vsel %vm1605, %v1734, %v1730
        %v1736 = vlaneseq
        %v1737 = vshrl.u32 %v1736, 7
        %v1738 = vsub.s32 %v1607, %v1737
        %v1739 = vrot.slane %v1416, %v1738
        %v1740 = vsel %vm1612, %v1739, %v1735
        %v1741 = vlaneseq
        %v1742 = vshrl.u32 %v1741, 7
        %v1743 = vsub.s32 %v1614, %v1742
        %v1744 = vrot.slane %v1419, %v1743
        %v1745 = vsel %vm1619, %v1744, %v1740
        %v1746 = vlaneseq
        %v1747 = vshrl.u32 %v1746, 7
        %v1748 = vsub.s32 %v1621, %v1747
        %v1749 = vrot.slane %v1422, %v1748
        %v1750 = vsel %vm1626, %v1749, %v1745
        %v1751 = vlaneseq
        %v1752 = vshrl.u32 %v1751, 7
        %v1753 = vsub.s32 %v1628, %v1752
        %v1754 = vrot.slane %v1425, %v1753
        %v1755 = vsel %vm1633, %v1754, %v1750
        %v1756 = vlaneseq
        %v1757 = vshrl.u32 %v1756, 7
        %v1758 = vsub.s32 %v1635, %v1757
        %v1759 = vrot.slane %v1428, %v1758
        %v1760 = vsel %vm1640, %v1759, %v1755
        %v1761 = vlaneseq
        %v1762 = vshrl.u32 %v1761, 7
        %v1763 = vsub.s32 %v1642, %v1762
        %v1764 = vrot.slane %v1431, %v1763
        %v1765 = vsel %vm1647, %v1764, %v1760
        %v1766 = vlaneseq
        %v1767 = vshrl.u32 %v1766, 7
        %v1768 = vsub.s32 %v1595, %v1767
        %v1769 = vrot.slane %v1434, %v1768
        %v1770 = vlaneseq
        %v1771 = vshrl.u32 %v1770, 7
        %v1772 = vsub.s32 %v1600, %v1771
        %v1773 = vrot.slane %v1437, %v1772
        %v1774 = vsel %vm1605, %v1773, %v1769
        %v1775 = vlaneseq
        %v1776 = vshrl.u32 %v1775, 7
        %v1777 = vsub.s32 %v1607, %v1776
        %v1778 = vrot.slane %v1440, %v1777
        %v1779 = vsel %vm1612, %v1778, %v1774
        %v1780 = vlaneseq
        %v1781 = vshrl.u32 %v1780, 7
        %v1782 = vsub.s32 %v1614, %v1781
        %v1783 = vrot.slane %v1443, %v1782
        %v1784 = vsel %vm1619, %v1783, %v1779
        %v1785 = vlaneseq
        %v1786 = vshrl.u32 %v1785, 7
        %v1787 = vsub.s32 %v1621, %v1786
        %v1788 = vrot.slane %v1446, %v1787
        %v1789 = vsel %vm1626, %v1788, %v1784
        %v1790 = vlaneseq
        %v1791 = vshrl.u32 %v1790, 7
        %v1792 = vsub.s32 %v1628, %v1791
        %v1793 = vrot.slane %v1449, %v1792
        %v1794 = vsel %vm1633, %v1793, %v1789
        %v1795 = vlaneseq
        %v1796 = vshrl.u32 %v1795, 7
        %v1797 = vsub.s32 %v1635, %v1796
        %v1798 = vrot.slane %v1452, %v1797
        %v1799 = vsel %vm1640, %v1798, %v1794
        %v1800 = vlaneseq
        %v1801 = vshrl.u32 %v1800, 7
        %v1802 = vsub.s32 %v1642, %v1801
        %v1803 = vrot.slane %v1455, %v1802
        %v1804 = vsel %vm1647, %v1803, %v1799
        %v1805 = vlaneseq
        %v1806 = vshrl.u32 %v1805, 7
        %v1807 = vsub.s32 %v1595, %v1806
        %v1808 = vrot.slane %v1458, %v1807
        %v1809 = vlaneseq
        %v1810 = vshrl.u32 %v1809, 7
        %v1811 = vsub.s32 %v1600, %v1810
        %v1812 = vrot.slane %v1461, %v1811
        %v1813 = vsel %vm1605, %v1812, %v1808
        %v1814 = vlaneseq
        %v1815 = vshrl.u32 %v1814, 7
        %v1816 = vsub.s32 %v1607, %v1815
        %v1817 = vrot.slane %v1464, %v1816
        %v1818 = vsel %vm1612, %v1817, %v1813
        %v1819 = vlaneseq
        %v1820 = vshrl.u32 %v1819, 7
        %v1821 = vsub.s32 %v1614, %v1820
        %v1822 = vrot.slane %v1467, %v1821
        %v1823 = vsel %vm1619, %v1822, %v1818
        %v1824 = vlaneseq
        %v1825 = vshrl.u32 %v1824, 7
        %v1826 = vsub.s32 %v1621, %v1825
        %v1827 = vrot.slane %v1470, %v1826
        %v1828 = vsel %vm1626, %v1827, %v1823
        %v1829 = vlaneseq
        %v1830 = vshrl.u32 %v1829, 7
        %v1831 = vsub.s32 %v1628, %v1830
        %v1832 = vrot.slane %v1473, %v1831
        %v1833 = vsel %vm1633, %v1832, %v1828
        %v1834 = vlaneseq
        %v1835 = vshrl.u32 %v1834, 7
        %v1836 = vsub.s32 %v1635, %v1835
        %v1837 = vrot.slane %v1476, %v1836
        %v1838 = vsel %vm1640, %v1837, %v1833
        %v1839 = vlaneseq
        %v1840 = vshrl.u32 %v1839, 7
        %v1841 = vsub.s32 %v1642, %v1840
        %v1842 = vrot.slane %v1479, %v1841
        %v1843 = vsel %vm1647, %v1842, %v1838
        %v1844 = vlaneseq
        %v1845 = vshrl.u32 %v1844, 7
        %v1846 = vsub.s32 %v1595, %v1845
        %v1847 = vrot.slane %v1482, %v1846
        %v1848 = vlaneseq
        %v1849 = vshrl.u32 %v1848, 7
        %v1850 = vsub.s32 %v1600, %v1849
        %v1851 = vrot.slane %v1485, %v1850
        %v1852 = vsel %vm1605, %v1851, %v1847
        %v1853 = vlaneseq
        %v1854 = vshrl.u32 %v1853, 7
        %v1855 = vsub.s32 %v1607, %v1854
        %v1856 = vrot.slane %v1488, %v1855
        %v1857 = vsel %vm1612, %v1856, %v1852
        %v1858 = vlaneseq
        %v1859 = vshrl.u32 %v1858, 7
        %v1860 = vsub.s32 %v1614, %v1859
        %v1861 = vrot.slane %v1491, %v1860
        %v1862 = vsel %vm1619, %v1861, %v1857
        %v1863 = vlaneseq
        %v1864 = vshrl.u32 %v1863, 7
        %v1865 = vsub.s32 %v1621, %v1864
        %v1866 = vrot.slane %v1494, %v1865
        %v1867 = vsel %vm1626, %v1866, %v1862
        %v1868 = vlaneseq
        %v1869 = vshrl.u32 %v1868, 7
        %v1870 = vsub.s32 %v1628, %v1869
        %v1871 = vrot.slane %v1497, %v1870
        %v1872 = vsel %vm1633, %v1871, %v1867
        %v1873 = vlaneseq
        %v1874 = vshrl.u32 %v1873, 7
        %v1875 = vsub.s32 %v1635, %v1874
        %v1876 = vrot.slane %v1500, %v1875
        %v1877 = vsel %vm1640, %v1876, %v1872
        %v1878 = vlaneseq
        %v1879 = vshrl.u32 %v1878, 7
        %v1880 = vsub.s32 %v1642, %v1879
        %v1881 = vrot.slane %v1503, %v1880
        %v1882 = vsel %vm1647, %v1881, %v1877
        %v1883 = vlaneseq
        %v1884 = vshrl.u32 %v1883, 7
        %v1885 = vsub.s32 %v1595, %v1884
        %v1886 = vrot.slane %v1506, %v1885
        %v1887 = vlaneseq
        %v1888 = vshrl.u32 %v1887, 7
        %v1889 = vsub.s32 %v1600, %v1888
        %v1890 = vrot.slane %v1509, %v1889
        %v1891 = vsel %vm1605, %v1890, %v1886
        %v1892 = vlaneseq
        %v1893 = vshrl.u32 %v1892, 7
        %v1894 = vsub.s32 %v1607, %v1893
        %v1895 = vrot.slane %v1512, %v1894
        %v1896 = vsel %vm1612, %v1895, %v1891
        %v1897 = vlaneseq
        %v1898 = vshrl.u32 %v1897, 7
        %v1899 = vsub.s32 %v1614, %v1898
        %v1900 = vrot.slane %v1515, %v1899
        %v1901 = vsel %vm1619, %v1900, %v1896
        %v1902 = vlaneseq
        %v1903 = vshrl.u32 %v1902, 7
        %v1904 = vsub.s32 %v1621, %v1903
        %v1905 = vrot.slane %v1518, %v1904
        %v1906 = vsel %vm1626, %v1905, %v1901
        %v1907 = vlaneseq
        %v1908 = vshrl.u32 %v1907, 7
        %v1909 = vsub.s32 %v1628, %v1908
        %v1910 = vrot.slane %v1521, %v1909
        %v1911 = vsel %vm1633, %v1910, %v1906
        %v1912 = vlaneseq
        %v1913 = vshrl.u32 %v1912, 7
        %v1914 = vsub.s32 %v1635, %v1913
        %v1915 = vrot.slane %v1524, %v1914
        %v1916 = vsel %vm1640, %v1915, %v1911
        %v1917 = vlaneseq
        %v1918 = vshrl.u32 %v1917, 7
        %v1919 = vsub.s32 %v1642, %v1918
        %v1920 = vrot.slane %v1527, %v1919
        %v1921 = vsel %vm1647, %v1920, %v1916
        %vm1922 = vcmask 1041409
        %v1923 = vsel %vm1922, %v1687, %v1648
        %vm1924 = vcmask 1042434
        %v1925 = vsel %vm1924, %v1726, %v1923
        %vm1926 = vcmask 1043459
        %v1927 = vsel %vm1926, %v1765, %v1925
        %vm1928 = vcmask 1044484
        %v1929 = vsel %vm1928, %v1804, %v1927
        %vm1930 = vcmask 1045509
        %v1931 = vsel %vm1930, %v1843, %v1929
        %vm1932 = vcmask 1046534
        %v1933 = vsel %vm1932, %v1882, %v1931
        %vm1934 = vcmask 1047559
        %v1935 = vsel %vm1934, %v1921, %v1933
        %v1937 = vsel %vm1529, -1e+10, %v1935
        %vm1938 = vcmask 523264
        %v1939 = vsel %vm1938, %v1937, -inf
        %1940 = vmax.xlane.f32.xlu0 %v1939
        %v1941 = vpop.xlane.xlu0 %1940
        %v1942 = vsub.f32 %v1937, %v1941
        %v1943 = vmul.f32 %v1942, 1.442695
        %v1944 = vpow.pop %v1943
        %v1945 = vsel %vm1938, %v1944, 0.0
        %1946 = vadd.xlane.f32.xlu0 %v1945
        %v1947 = vpop.xlane.xlu0 %1946
        %v1948 = vrcp.pop %v1947
        %v1949 = vmul.f32 %v1944, %v1948
        %1950 = vst.msk [vmem:[%s300] sm:$0xff] %vm1938, %v1949
        %s1951 = sand.u32 %s191, 1
        %s1952 = scalar_lea.sflag [#allocation3], %s1951
        %s1953 = sand.u32 %s191, 1
        %s1954 = smul.addr %s1953, 8
        %s1955 = scalar_lea.vmem [#allocation2], %s1954
        // Predicated region
        $region49: #{tpu_custom_call.1} parent=47 // pred_check
          %p1956 = pneg %p201
        $region50: #{tpu_custom_call.1} parent=47 // pred_check_branch
          %1958 = sbr.rel (%p1956) target = $region52
        $region51: #{tpu_custom_call.1} parent=47 // pred_region
          %s1960 = ssub.s32 128, 128
          %1961 = vsyncadd %s1952, %s1960
          %s1962 = smul.addr %s21, 128
          %s1963 = scalar_lea.hbm %s7, %s1962
          %s1965 = sshll.u32 %s1955, 4
          %s1966 = int_to_ptr.vmem [resolvable:$true] %s1965
          %1968 = dma.vmem_to_hbm [thread:$0]  %s1966, 128, %s1963, %s1952
        $region52: #{tpu_custom_call.1} parent=47 // pred_fallthru
          _
      $region48: #{tpu_custom_call.1} parent=5 // pred_fallthru
        _
      %p1969 = scmp.le.s32.totalorder 2, %s16
      // Predicated region
      $region53: #{tpu_custom_call.1} parent=5 // pred_check
        %p1970 = pneg %p1969
      $region54: #{tpu_custom_call.1} parent=5 // pred_check_branch
        %1972 = sbr.rel (%p1970) target = $region56
      $region55: #{tpu_custom_call.1} parent=5 // pred_region
        %s1973 = ssub.s32 %s16, 2
        // Predicated region
        $region57: #{tpu_custom_call.1} parent=55 // pred_check
          %p1974 = pneg %p207
        $region58: #{tpu_custom_call.1} parent=55 // pred_check_branch
          %1976 = sbr.rel (%p1974) target = $region60
        $region59: #{tpu_custom_call.1} parent=55 // pred_region
          %s1977 = sand.u32 %s192, 1
          %s1978 = scalar_lea.sflag [#allocation3], %s1977
          %s1979 = sand.u32 %s192, 1
          %s1980 = smul.addr %s1979, 8
          %s1981 = scalar_lea.vmem [#allocation2], %s1980
          %1982 = dma.done %s1978, 128
        $region60: #{tpu_custom_call.1} parent=55 // pred_fallthru
          _
      $region56: #{tpu_custom_call.1} parent=5 // pred_fallthru
        _
    $region6: #{tpu_custom_call.1} parent=1 // loop_footer
      %s20 = sadd.s32 1, %s16
    $region7: #{tpu_custom_call.1} parent=1 // loop_footer_branch
      %15 = sbr.rel target = $region3
    $region8: #{tpu_custom_call.1} parent=1 // loop_exit
      _
    %1983 = vsyncpa [#allocation3], 1
    %s1984 = scalar_lea.sflag [#allocation3], 1
    %1985 = vsyncpa %s1984, 1

</llo_original>
